<compile_context>
chip_gen: v7x
topology: tpu7x:2x2x1
jax: 0.10.0
libtpu: 0.0.40
codegen_flags: <defaults>
</compile_context>

<pallas_src>
import functools
import math

import jax
import jax.numpy as jnp
from jax.experimental import pallas as pl
from jax.experimental.pallas import tpu as pltpu

MV_COMPONENTS = 16
MV_EPSILON = 0.01          # EquiLayerNorm epsilon
LN_EPSILON = 1e-5          # torch.nn.functional.layer_norm default eps

# TODO(synk): abs_squared_norm is implemented as the unweighted sum of squares
# over the 16 components (|metric factor| == 1 per GA(1,3) blade); non-unit
# per-blade weights could be folded into the block-diagonal matrix below.


def _sublane_multiple(dtype):
    itemsize = jnp.dtype(dtype).itemsize
    return {4: 8, 2: 16, 1: 32}.get(itemsize, 8)


def _pick_fold(rows, width, max_lanes=512):
    """#rows folded side-by-side into one lane-row; always divides `rows`."""
    if width % 128 == 0:
        return 1
    k128 = math.lcm(width, 128) // width      # smallest k with (k*width) % 128 == 0
    if k128 * width <= max_lanes and rows % k128 == 0:
        return k128
    best = 1
    for k in range(2, max(1, max_lanes // width) + 1):
        if rows % k == 0:
            if (k * width) % 128 == 0:
                return k                      # smallest lane-dense divisor
            best = k
    return best


def _block_diag_ones(k, width):
    """(k*width, k*width) f32 matrix with ones(width, width) diagonal blocks."""
    seg = jnp.arange(k * width, dtype=jnp.int32) // width
    return (seg[:, None] == seg[None, :]).astype(jnp.float32)


def _equi_layer_norm_kernel(mv_ref, s_ref, bd_mv_ref, bd_s_ref,
                            mv_out_ref, s_out_ref, *, inv_c, inv_s):
    highest = jax.lax.Precision.HIGHEST

    # ---- multivector branch: x / sqrt(mean_c |x|^2 + eps) -------------------
    x = mv_ref[...].astype(jnp.float32)            # one dense load + cast
    sq = x * x                                     # one full-width square
    # Segmented sum over each C*16-wide row segment, already broadcast back
    # across that segment's lanes, as one matmul on the (idle) MXU.
    norm = jnp.dot(sq, bd_mv_ref[...], precision=highest,
                   preferred_element_type=jnp.float32)
    mv_out_ref[...] = (
        x * jax.lax.rsqrt(norm * inv_c + MV_EPSILON)).astype(mv_out_ref.dtype)

    # ---- scalar branch: LayerNorm over the last dim (no affine), two-pass ---
    s = s_ref[...].astype(jnp.float32)
    mean = jnp.dot(s, bd_s_ref[...], precision=highest,
                   preferred_element_type=jnp.float32) * inv_s
    centered = s - mean
    var = jnp.dot(centered * centered, bd_s_ref[...], precision=highest,
                  preferred_element_type=jnp.float32) * inv_s
    s_out_ref[...] = (
        centered * jax.lax.rsqrt(var + LN_EPSILON)).astype(s_out_ref.dtype)


def equi_layer_norm(multivectors, scalars, *, row_tile=8192):
    """multivectors: (..., C, 16), scalars: (..., S). Returns (mv_out, s_out)."""
    *batch_mv, C, comp = multivectors.shape
    if comp != MV_COMPONENTS:
        raise ValueError("last multivector dim must be 16")
    *batch_s, S = scalars.shape
    if tuple(batch_mv) != tuple(batch_s):
        raise ValueError("leading dims of multivectors and scalars must match")

    rows = 1
    for d in batch_mv:
        rows *= int(d)
    w_mv = C * MV_COMPONENTS

    # Fold k consecutive rows into one lane-row (free contiguous reshape); k is
    # chosen as a divisor of `rows`, so no padding / copies are ever needed.
    k_mv = _pick_fold(rows, w_mv)
    k_s = _pick_fold(rows, S)

    mvf = multivectors.reshape(rows // k_mv, k_mv * w_mv)
    sf = scalars.reshape(rows // k_s, k_s * S)

    bd_mv = _block_diag_ones(k_mv, w_mv)
    bd_s = _block_diag_ones(k_s, S)

    unit = math.lcm(k_mv * _sublane_multiple(multivectors.dtype),
                    k_s * _sublane_multiple(scalars.dtype))

    # Per original row: input + output blocks, double-buffered.
    bytes_per_row = 4 * (w_mv * jnp.dtype(multivectors.dtype).itemsize
                         + S * jnp.dtype(scalars.dtype).itemsize)
    bd_bytes = 2 * 4 * (int(bd_mv.size) + int(bd_s.size))
    data_budget = 24 * 1024 * 1024

    if rows < 2 * unit:
        # Tiny input: a single block equal to the full (folded) arrays, so no
        # (8,128) alignment requirement and still no padding.
        grid = (1,)
        tm, ts = rows // k_mv, rows // k_s
    else:
        max_rows = max(unit, (data_budget // bytes_per_row) // unit * unit)
        rt = max(unit, (min(int(row_tile), max_rows, rows) // unit) * unit)
        if rt >= rows:
            # Keep >= 2 grid steps so both v7x TensorCores get work.
            rt = max(unit, ((rows // 2) // unit) * unit)
        grid = (pl.cdiv(rows, rt),)          # ragged last block handled by Pallas
        tm, ts = rt // k_mv, rt // k_s

    rows_per_step = tm * k_mv
    vmem_limit = int(min(40 * 1024 * 1024,
                         max(16 * 1024 * 1024,
                             bytes_per_row * rows_per_step + bd_bytes
                             + 8 * 1024 * 1024)))

    kernel = functools.partial(_equi_layer_norm_kernel,
                               inv_c=1.0 / float(C), inv_s=1.0 / float(S))

    mv_of, s_of = pl.pallas_call(
        kernel,
        out_shape=(
            jax.ShapeDtypeStruct(mvf.shape, multivectors.dtype),
            jax.ShapeDtypeStruct(sf.shape, scalars.dtype),
        ),
        grid_spec=pltpu.PrefetchScalarGridSpec(
            num_scalar_prefetch=0,
            grid=grid,
            in_specs=[
                pl.BlockSpec((tm, k_mv * w_mv), lambda i: (i, 0)),
                pl.BlockSpec((ts, k_s * S), lambda i: (i, 0)),
                pl.BlockSpec(bd_mv.shape, lambda i: (0, 0)),   # fetched once
                pl.BlockSpec(bd_s.shape, lambda i: (0, 0)),    # fetched once
            ],
            out_specs=[
                pl.BlockSpec((tm, k_mv * w_mv), lambda i: (i, 0)),
                pl.BlockSpec((ts, k_s * S), lambda i: (i, 0)),
            ],
        ),
        compiler_params=pltpu.CompilerParams(
            dimension_semantics=("parallel",),
            vmem_limit_bytes=vmem_limit,
        ),
    )(mvf, sf, bd_mv, bd_s)

    mv_out = mv_of.reshape(*batch_mv, C, MV_COMPONENTS)
    s_out = s_of.reshape(*batch_s, S)
    return mv_out, s_out


def _reference(multivectors, scalars):
    """Pure-JAX reference matching the PyTorch forward."""
    mv = multivectors.astype(jnp.float32)
    sq = jnp.sum(mv * mv, axis=-1, keepdims=True)     # GA abs-squared norm
    sq = jnp.mean(sq, axis=-2, keepdims=True)         # mean over channels
    mv_out = mv / jnp.sqrt(sq + MV_EPSILON)

    s = scalars.astype(jnp.float32)
    mean = jnp.mean(s, axis=-1, keepdims=True)
    var = jnp.mean((s - mean) ** 2, axis=-1, keepdims=True)
    s_out = (s - mean) / jnp.sqrt(var + LN_EPSILON)
    return mv_out.astype(multivectors.dtype), s_out.astype(scalars.dtype)


if __name__ == "__main__":
    key = jax.random.PRNGKey(0)
    k1, k2 = jax.random.split(key)

    batch, seq, mv_channels, s_channels = 2, 8, 4, 32
    multivectors = jax.random.normal(
        k1, (batch, seq, mv_channels, MV_COMPONENTS), dtype=jnp.float32)
    scalars = jax.random.normal(k2, (batch, seq, s_channels), dtype=jnp.float32)

    mv_out, s_out = equi_layer_norm(multivectors, scalars)
    jax.block_until_ready((mv_out, s_out))

    mv_ref, s_ref = _reference(multivectors, scalars)
    assert mv_out.shape == multivectors.shape and s_out.shape == scalars.shape
    assert jnp.allclose(mv_out, mv_ref, atol=1e-5, rtol=1e-5)
    assert jnp.allclose(s_out, s_ref, atol=1e-5, rtol=1e-5)

    print("KERNEL_OK")
</pallas_src>

<mosaic_0001>
module attributes {stable_mosaic.version = 11 : i64} {
  func.func @_equi_layer_norm_kernel(%arg0: i32, %arg1: memref<8x128xf32, #tpu.memory_space<vmem>>, %arg2: memref<4x128xf32, #tpu.memory_space<vmem>>, %arg3: memref<128x128xf32, #tpu.memory_space<vmem>>, %arg4: memref<128x128xf32, #tpu.memory_space<vmem>>, %arg5: memref<8x128xf32, #tpu.memory_space<vmem>>, %arg6: memref<4x128xf32, #tpu.memory_space<vmem>>) attributes {dimension_semantics = [#tpu.dimension_semantics<parallel>], iteration_bounds = array<i64: 1>, scalar_prefetch = 0 : i64, scratch_operands = 0 : i64, tpu.core_type = #tpu.core_type<tc>, window_params = [{transform_indices = @transform_0, window_bounds = array<i64: 8, 128>}, {transform_indices = @transform_1, window_bounds = array<i64: 4, 128>}, {pipeline_mode = #tpu.pipeline_mode<synchronous>, transform_indices = @transform_2, window_bounds = array<i64: 128, 128>}, {pipeline_mode = #tpu.pipeline_mode<synchronous>, transform_indices = @transform_3, window_bounds = array<i64: 128, 128>}, {transform_indices = @transform_4, window_bounds = array<i64: 8, 128>}, {transform_indices = @transform_5, window_bounds = array<i64: 4, 128>}]} {
    %c0 = arith.constant 0 : index
    %c0_0 = arith.constant 0 : index
    %0 = vector.load %arg1[%c0, %c0_0] : memref<8x128xf32, #tpu.memory_space<vmem>>, vector<8x128xf32>
    %1 = arith.mulf %0, %0 : vector<8x128xf32>
    %c0_1 = arith.constant 0 : index
    %c0_2 = arith.constant 0 : index
    %2 = vector.load %arg3[%c0_1, %c0_2] : memref<128x128xf32, #tpu.memory_space<vmem>>, vector<128x128xf32>
    %cst = arith.constant dense<0.000000e+00> : vector<8x128xf32>
    %3 = tpu.matmul %1, %2, %cst {dimension_numbers = #tpu.dot_dimension_numbers<[1], [0], [0], [1], [0, 0, 1, 1], [], []>, precision = #tpu.contract_precision<fp32>} : vector<8x128xf32>, vector<128x128xf32>, vector<8x128xf32> -> vector<8x128xf32>
    %cst_3 = arith.constant 2.500000e-01 : f32
    %4 = vector.broadcast %cst_3 : f32 to vector<8x128xf32>
    %5 = arith.mulf %3, %4 : vector<8x128xf32>
    %cst_4 = arith.constant 0.00999999977 : f32
    %6 = vector.broadcast %cst_4 : f32 to vector<8x128xf32>
    %7 = arith.addf %5, %6 : vector<8x128xf32>
    %8 = math.rsqrt %7 : vector<8x128xf32>
    %9 = arith.mulf %0, %8 : vector<8x128xf32>
    %c0_5 = arith.constant 0 : index
    %c0_6 = arith.constant 0 : index
    %10 = vector.load %arg5[%c0_5, %c0_6] : memref<8x128xf32, #tpu.memory_space<vmem>>, vector<8x128xf32>
    tpu.vector_store %arg5[%c0_5, %c0_6], %9 {strides = array<i32>} : memref<8x128xf32, #tpu.memory_space<vmem>>, vector<8x128xf32>,
    %c0_7 = arith.constant 0 : index
    %c0_8 = arith.constant 0 : index
    %11 = vector.load %arg2[%c0_7, %c0_8] : memref<4x128xf32, #tpu.memory_space<vmem>>, vector<4x128xf32>
    %c0_9 = arith.constant 0 : index
    %c0_10 = arith.constant 0 : index
    %12 = vector.load %arg4[%c0_9, %c0_10] : memref<128x128xf32, #tpu.memory_space<vmem>>, vector<128x128xf32>
    %cst_11 = arith.constant dense<0.000000e+00> : vector<4x128xf32>
    %13 = tpu.matmul %11, %12, %cst_11 {dimension_numbers = #tpu.dot_dimension_numbers<[1], [0], [0], [1], [0, 0, 1, 1], [], []>, precision = #tpu.contract_precision<fp32>} : vector<4x128xf32>, vector<128x128xf32>, vector<4x128xf32> -> vector<4x128xf32>
    %cst_12 = arith.constant 3.125000e-02 : f32
    %14 = vector.broadcast %cst_12 : f32 to vector<4x128xf32>
    %15 = arith.mulf %13, %14 : vector<4x128xf32>
    %16 = arith.subf %11, %15 : vector<4x128xf32>
    %17 = arith.mulf %16, %16 : vector<4x128xf32>
    %c0_13 = arith.constant 0 : index
    %c0_14 = arith.constant 0 : index
    %18 = vector.load %arg4[%c0_13, %c0_14] : memref<128x128xf32, #tpu.memory_space<vmem>>, vector<128x128xf32>
    %cst_15 = arith.constant dense<0.000000e+00> : vector<4x128xf32>
    %19 = tpu.matmul %17, %18, %cst_15 {dimension_numbers = #tpu.dot_dimension_numbers<[1], [0], [0], [1], [0, 0, 1, 1], [], []>, precision = #tpu.contract_precision<fp32>} : vector<4x128xf32>, vector<128x128xf32>, vector<4x128xf32> -> vector<4x128xf32>
    %cst_16 = arith.constant 3.125000e-02 : f32
    %20 = vector.broadcast %cst_16 : f32 to vector<4x128xf32>
    %21 = arith.mulf %19, %20 : vector<4x128xf32>
    %cst_17 = arith.constant 9.99999974E-6 : f32
    %22 = vector.broadcast %cst_17 : f32 to vector<4x128xf32>
    %23 = arith.addf %21, %22 : vector<4x128xf32>
    %24 = math.rsqrt %23 : vector<4x128xf32>
    %25 = arith.mulf %16, %24 : vector<4x128xf32>
    %c0_18 = arith.constant 0 : index
    %c0_19 = arith.constant 0 : index
    %26 = vector.load %arg6[%c0_18, %c0_19] : memref<4x128xf32, #tpu.memory_space<vmem>>, vector<4x128xf32>
    tpu.vector_store %arg6[%c0_18, %c0_19], %25 {strides = array<i32>} : memref<4x128xf32, #tpu.memory_space<vmem>>, vector<4x128xf32>,
    return
  }
  func.func @transform_0(%arg0: i32) -> (i32, i32) {
    %c0_i32 = arith.constant 0 : i32
    %c0_i32_0 = arith.constant 0 : i32
    return %arg0, %c0_i32 : i32, i32
  }
  func.func @transform_1(%arg0: i32) -> (i32, i32) {
    %c0_i32 = arith.constant 0 : i32
    %c0_i32_0 = arith.constant 0 : i32
    return %arg0, %c0_i32 : i32, i32
  }
  func.func @transform_2(%arg0: i32) -> (i32, i32) {
    %c0_i32 = arith.constant 0 : i32
    %c0_i32_0 = arith.constant 0 : i32
    %c0_i32_1 = arith.constant 0 : i32
    return %c0_i32, %c0_i32_0 : i32, i32
  }
  func.func @transform_3(%arg0: i32) -> (i32, i32) {
    %c0_i32 = arith.constant 0 : i32
    %c0_i32_0 = arith.constant 0 : i32
    %c0_i32_1 = arith.constant 0 : i32
    return %c0_i32, %c0_i32_0 : i32, i32
  }
  func.func @transform_4(%arg0: i32) -> (i32, i32) {
    %c0_i32 = arith.constant 0 : i32
    %c0_i32_0 = arith.constant 0 : i32
    return %arg0, %c0_i32 : i32, i32
  }
  func.func @transform_5(%arg0: i32) -> (i32, i32) {
    %c0_i32 = arith.constant 0 : i32
    %c0_i32_0 = arith.constant 0 : i32
    return %arg0, %c0_i32 : i32, i32
  }
}

</mosaic_0001>

<llo_original>
// kernel: tpu_custom_call.1
$region0: #{tpu_custom_call.1}
  #allocation0 [shape = 'u32[]', space=smem, size = 0x4, offset = 0x4, fixed_abs, tag = 'smem constant byte address 0x4 - core index']
  #allocation1 [shape = 'u32[144,128]{1,0:T(1,128)}', space=vmem, size = 0x12000, scoped, tag = 'internal scratch']
  %s0 = inlined_call_operand.hbm [shape: f32[8,128], index: 0, kind: input, shape index: {}]
  %s1 = inlined_call_operand.hbm [shape: f32[4,128], index: 1, kind: input, shape index: {}]
  %s2 = inlined_call_operand.hbm [shape: f32[128,128], index: 2, kind: input, shape index: {}]
  %s3 = inlined_call_operand.hbm [shape: f32[128,128], index: 3, kind: input, shape index: {}]
  %s4 = inlined_call_operand.hbm [shape: f32[8,128], index: 4, kind: output, shape index: {0}]
  %s5 = inlined_call_operand.hbm [shape: f32[4,128], index: 5, kind: output, shape index: {1}]
  %6 = xla_tuple %s4, %s5
  %s7 = sld [smem:[#allocation0]]
  $region50: #{tpu_custom_call.1} parent=0
    _
  %s9 = ssub.s32 1, %s7
  %s10 = scalar_select 0, %s9, %s7
  $region1: #{tpu_custom_call.1} parent=0
    #allocation2 [shape = 'u8[4096]{0}', space=vmem, size = 0x1000, scoped, tag = 'input window, operand 0, single buffered']
    #allocation3 [shape = 's32[1]{0}', space=sflag, size = 0x4, scoped, tag = 'scoped memory for tpu_custom_call.1']
    #allocation4 [shape = 's32[1]{0}', space=sflag, size = 0x4, scoped, tag = 'scoped memory for tpu_custom_call.1']
    #allocation5 [shape = 'u8[2048]{0}', space=vmem, size = 0x800, scoped, tag = 'input window, operand 1, single buffered']
    #allocation6 [shape = 's32[1]{0}', space=sflag, size = 0x4, scoped, tag = 'scoped memory for tpu_custom_call.1']
    #allocation7 [shape = 'u8[65536]{0}', space=vmem, size = 0x10000, scoped, tag = 'input window, operand 2, single buffered']
    #allocation8 [shape = 'u8[65536]{0}', space=vmem, size = 0x10000, scoped, tag = 'input window, operand 3, single buffered']
    #allocation9 [shape = 's32[1]{0}', space=sflag, size = 0x4, scoped, tag = 'scoped memory for tpu_custom_call.1']
    #allocation10 [shape = 'u8[4096]{0}', space=vmem, size = 0x1000, scoped, tag = 'output window, operand 0, single buffered']
    #allocation11 [shape = 'u8[2048]{0}', space=vmem, size = 0x800, scoped, tag = 'output window, operand 1, single buffered']
    #allocation12 [shape = 's32[1]{0}', space=sflag, size = 0x4, scoped, tag = 'scoped memory for tpu_custom_call.1']
    %11 = vsyncpa [#allocation3], 0
    %12 = vsyncpa [#allocation6], 0
    %13 = vsyncpa [#allocation9], 0
    %14 = vsyncpa [#allocation4], 0
    %15 = vsyncpa [#allocation12], 0
    // Predicated region
    $region2: #{tpu_custom_call.1} parent=1 // pred_check
      _
    $region3: #{tpu_custom_call.1} parent=1 // pred_check_branch
      %17 = sbr.rel (0) target = $region5
    $region4: #{tpu_custom_call.1} parent=1 // pred_region
      %s19 = ssub.s32 128, 128
      %20 = vsyncadd [#allocation3], %s19
      %s22 = sshll.u32 [#allocation2], 4
      %s23 = int_to_ptr.vmem [resolvable:$true] %s22
      %25 = dma.hbm_to_vmem [thread:$0]  %s0, 128, %s23, [#allocation3]
    $region5: #{tpu_custom_call.1} parent=1 // pred_fallthru
      _
    // Predicated region
    $region6: #{tpu_custom_call.1} parent=1 // pred_check
      _
    $region7: #{tpu_custom_call.1} parent=1 // pred_check_branch
      %27 = sbr.rel (0) target = $region9
    $region8: #{tpu_custom_call.1} parent=1 // pred_region
      %s29 = ssub.s32 64, 64
      %30 = vsyncadd [#allocation6], %s29
      %s32 = sshll.u32 [#allocation5], 4
      %s33 = int_to_ptr.vmem [resolvable:$true] %s32
      %35 = dma.hbm_to_vmem [thread:$0]  %s1, 64, %s33, [#allocation6]
    $region9: #{tpu_custom_call.1} parent=1 // pred_fallthru
      _
    // Predicated region
    $region10: #{tpu_custom_call.1} parent=1 // pred_check
      _
    $region11: #{tpu_custom_call.1} parent=1 // pred_check_branch
      %37 = sbr.rel (0) target = $region13
    $region12: #{tpu_custom_call.1} parent=1 // pred_region
      %s39 = ssub.s32 2048, 2048
      %40 = vsyncadd [#allocation6], %s39
      %s41 = sshll.u32 [#allocation7], 4
      %s42 = int_to_ptr.vmem [resolvable:$true] %s41
      %47 = dma.hbm_to_vmem [thread:$0]  %s2, 2048, %s42, [#allocation6], 128, 128, 8
    $region13: #{tpu_custom_call.1} parent=1 // pred_fallthru
      _
    // Predicated region
    $region14: #{tpu_custom_call.1} parent=1 // pred_check
      _
    $region15: #{tpu_custom_call.1} parent=1 // pred_check_branch
      %49 = sbr.rel (0) target = $region17
    $region16: #{tpu_custom_call.1} parent=1 // pred_region
      %s51 = ssub.s32 2048, 2048
      %52 = vsyncadd [#allocation9], %s51
      %s53 = sshll.u32 [#allocation8], 4
      %s54 = int_to_ptr.vmem [resolvable:$true] %s53
      %59 = dma.hbm_to_vmem [thread:$0]  %s3, 2048, %s54, [#allocation9], 128, 128, 8
    $region17: #{tpu_custom_call.1} parent=1 // pred_fallthru
      _
    // Predicated region
    $region18: #{tpu_custom_call.1} parent=1 // pred_check
      _
    $region19: #{tpu_custom_call.1} parent=1 // pred_check_branch
      %61 = sbr.rel (0) target = $region21
    $region20: #{tpu_custom_call.1} parent=1 // pred_region
      %62 = dma.done [#allocation3], 128
    $region21: #{tpu_custom_call.1} parent=1 // pred_fallthru
      _
    // Predicated region
    $region22: #{tpu_custom_call.1} parent=1 // pred_check
      _
    $region23: #{tpu_custom_call.1} parent=1 // pred_check_branch
      %64 = sbr.rel (0) target = $region25
    $region24: #{tpu_custom_call.1} parent=1 // pred_region
      %65 = dma.done [#allocation6], 64
    $region25: #{tpu_custom_call.1} parent=1 // pred_fallthru
      _
    // Predicated region
    $region26: #{tpu_custom_call.1} parent=1 // pred_check
      _
    $region27: #{tpu_custom_call.1} parent=1 // pred_check_branch
      %67 = sbr.rel (0) target = $region29
    $region28: #{tpu_custom_call.1} parent=1 // pred_region
      %68 = dma.done [#allocation6], 2048
    $region29: #{tpu_custom_call.1} parent=1 // pred_fallthru
      _
    // Predicated region
    $region30: #{tpu_custom_call.1} parent=1 // pred_check
      _
    $region31: #{tpu_custom_call.1} parent=1 // pred_check_branch
      %70 = sbr.rel (0) target = $region33
    $region32: #{tpu_custom_call.1} parent=1 // pred_region
      %71 = dma.done [#allocation9], 2048
    $region33: #{tpu_custom_call.1} parent=1 // pred_fallthru
      _
    %v72 = vld [vmem:[#allocation2] sm:$0xff]
    %v73 = vmul.f32 %v72, %v72
    %v74 = vld [vmem:[#allocation7] sm:$0xff]
    %v75 = vld [vmem:[#allocation7 + $0x8] sm:$0xff]
    %v76 = vld [vmem:[#allocation7 + $0x10] sm:$0xff]
    %v77 = vld [vmem:[#allocation7 + $0x18] sm:$0xff]
    %v78 = vld [vmem:[#allocation7 + $0x20] sm:$0xff]
    %v79 = vld [vmem:[#allocation7 + $0x28] sm:$0xff]
    %v80 = vld [vmem:[#allocation7 + $0x30] sm:$0xff]
    %v81 = vld [vmem:[#allocation7 + $0x38] sm:$0xff]
    %v82 = vld [vmem:[#allocation7 + $0x40] sm:$0xff]
    %v83 = vld [vmem:[#allocation7 + $0x48] sm:$0xff]
    %v84 = vld [vmem:[#allocation7 + $0x50] sm:$0xff]
    %v85 = vld [vmem:[#allocation7 + $0x58] sm:$0xff]
    %v86 = vld [vmem:[#allocation7 + $0x60] sm:$0xff]
    %v87 = vld [vmem:[#allocation7 + $0x68] sm:$0xff]
    %v88 = vld [vmem:[#allocation7 + $0x70] sm:$0xff]
    %v89 = vld [vmem:[#allocation7 + $0x78] sm:$0xff]
    %90 = vmatprep.subr.mxu0 0.0
    %v91 = vand.u32 %v74, 4294901760
    %92 = vmatpush1.msra.mxu0 %v91
    %93 = vmatprep.subr.mxu0 0.0
    %v94 = vand.u32 %v75, 4294901760
    %95 = vmatpush1.msra.mxu0 %v94
    %96 = vmatprep.subr.mxu0 0.0
    %v97 = vand.u32 %v76, 4294901760
    %98 = vmatpush1.msra.mxu0 %v97
    %99 = vmatprep.subr.mxu0 0.0
    %v100 = vand.u32 %v77, 4294901760
    %101 = vmatpush1.msra.mxu0 %v100
    %102 = vmatprep.subr.mxu0 0.0
    %v103 = vand.u32 %v78, 4294901760
    %104 = vmatpush1.msra.mxu0 %v103
    %105 = vmatprep.subr.mxu0 0.0
    %v106 = vand.u32 %v79, 4294901760
    %107 = vmatpush1.msra.mxu0 %v106
    %108 = vmatprep.subr.mxu0 0.0
    %v109 = vand.u32 %v80, 4294901760
    %110 = vmatpush1.msra.mxu0 %v109
    %111 = vmatprep.subr.mxu0 0.0
    %v112 = vand.u32 %v81, 4294901760
    %113 = vmatpush1.msra.mxu0 %v112
    %114 = vmatprep.subr.mxu0 0.0
    %v115 = vand.u32 %v82, 4294901760
    %116 = vmatpush1.msra.mxu0 %v115
    %117 = vmatprep.subr.mxu0 0.0
    %v118 = vand.u32 %v83, 4294901760
    %119 = vmatpush1.msra.mxu0 %v118
    %120 = vmatprep.subr.mxu0 0.0
    %v121 = vand.u32 %v84, 4294901760
    %122 = vmatpush1.msra.mxu0 %v121
    %123 = vmatprep.subr.mxu0 0.0
    %v124 = vand.u32 %v85, 4294901760
    %125 = vmatpush1.msra.mxu0 %v124
    %126 = vmatprep.subr.mxu0 0.0
    %v127 = vand.u32 %v86, 4294901760
    %128 = vmatpush1.msra.mxu0 %v127
    %129 = vmatprep.subr.mxu0 0.0
    %v130 = vand.u32 %v87, 4294901760
    %131 = vmatpush1.msra.mxu0 %v130
    %132 = vmatprep.subr.mxu0 0.0
    %v133 = vand.u32 %v88, 4294901760
    %134 = vmatpush1.msra.mxu0 %v133
    %135 = vmatprep.subr.mxu0 0.0
    %v136 = vand.u32 %v89, 4294901760
    %137 = vmatpush1.msra.mxu0 %v136
    %138 = vmatprep.subr.mxu0 0.0
    %139 = vmatpush1.msra.mxu0 0.0
    %140 = vmatprep.subr.mxu0 0.0
    %141 = vmatpush1.msra.mxu0 0.0
    %142 = vmatprep.subr.mxu0 0.0
    %143 = vmatpush1.msra.mxu0 0.0
    %144 = vmatprep.subr.mxu0 0.0
    %145 = vmatpush1.msra.mxu0 0.0
    %146 = vmatprep.subr.mxu0 0.0
    %147 = vmatpush1.msra.mxu0 0.0
    %148 = vmatprep.subr.mxu0 0.0
    %149 = vmatpush1.msra.mxu0 0.0
    %150 = vmatprep.subr.mxu0 0.0
    %151 = vmatpush1.msra.mxu0 0.0
    %152 = vmatprep.subr.mxu0 0.0
    %153 = vmatpush1.msra.mxu0 0.0
    %154 = vmatprep.subr.mxu0 0.0
    %155 = vmatpush1.msra.mxu0 0.0
    %156 = vmatprep.subr.mxu0 0.0
    %157 = vmatpush1.msra.mxu0 0.0
    %158 = vmatprep.subr.mxu0 0.0
    %159 = vmatpush1.msra.mxu0 0.0
    %160 = vmatprep.subr.mxu0 0.0
    %161 = vmatpush1.msra.mxu0 0.0
    %162 = vmatprep.subr.mxu0 0.0
    %163 = vmatpush1.msra.mxu0 0.0
    %164 = vmatprep.subr.mxu0 0.0
    %165 = vmatpush1.msra.mxu0 0.0
    %166 = vmatprep.subr.mxu0 0.0
    %167 = vmatpush1.msra.mxu0 0.0
    %168 = vmatprep.subr.mxu0 0.0
    %169 = vmatpush1.msra.mxu0 0.0
    %170 = vmatprep.mubr.f32.mxu0 0.0
    %v171 = vand.u32 %v73, 4294901760
    %v172 = vsub.f32 %v73, %v171
    %v173 = vand.u32 %v172, 4294901760
    %v174 = vsub.f32 %v172, %v173
    %v175 = vand.u32 %v174, 4294901760
    %176 = vmatmul.mubr.f32.gmra.mrb[0].mxu0 %v175
    %v177 = vpop.f32.mrb[0].mxu0
    %v178 = vadd.f32 0.0, %v177
    %v179 = vpop.f32.mrb[0].mxu0
    %180 = vdwg.mxu0
    %181 = vmatprep.subr.mxu0 0.0
    %v182 = vand.u32 %v74, 4294901760
    %v183 = vsub.f32 %v74, %v182
    %v184 = vand.u32 %v183, 4294901760
    %v185 = vsub.f32 %v183, %v184
    %v186 = vand.u32 %v185, 4294901760
    %187 = vmatpush1.msra.mxu0 %v186
    %188 = vmatprep.subr.mxu0 0.0
    %v189 = vand.u32 %v75, 4294901760
    %v190 = vsub.f32 %v75, %v189
    %v191 = vand.u32 %v190, 4294901760
    %v192 = vsub.f32 %v190, %v191
    %v193 = vand.u32 %v192, 4294901760
    %194 = vmatpush1.msra.mxu0 %v193
    %195 = vmatprep.subr.mxu0 0.0
    %v196 = vand.u32 %v76, 4294901760
    %v197 = vsub.f32 %v76, %v196
    %v198 = vand.u32 %v197, 4294901760
    %v199 = vsub.f32 %v197, %v198
    %v200 = vand.u32 %v199, 4294901760
    %201 = vmatpush1.msra.mxu0 %v200
    %202 = vmatprep.subr.mxu0 0.0
    %v203 = vand.u32 %v77, 4294901760
    %v204 = vsub.f32 %v77, %v203
    %v205 = vand.u32 %v204, 4294901760
    %v206 = vsub.f32 %v204, %v205
    %v207 = vand.u32 %v206, 4294901760
    %208 = vmatpush1.msra.mxu0 %v207
    %209 = vmatprep.subr.mxu0 0.0
    %v210 = vand.u32 %v78, 4294901760
    %v211 = vsub.f32 %v78, %v210
    %v212 = vand.u32 %v211, 4294901760
    %v213 = vsub.f32 %v211, %v212
    %v214 = vand.u32 %v213, 4294901760
    %215 = vmatpush1.msra.mxu0 %v214
    %216 = vmatprep.subr.mxu0 0.0
    %v217 = vand.u32 %v79, 4294901760
    %v218 = vsub.f32 %v79, %v217
    %v219 = vand.u32 %v218, 4294901760
    %v220 = vsub.f32 %v218, %v219
    %v221 = vand.u32 %v220, 4294901760
    %222 = vmatpush1.msra.mxu0 %v221
    %223 = vmatprep.subr.mxu0 0.0
    %v224 = vand.u32 %v80, 4294901760
    %v225 = vsub.f32 %v80, %v224
    %v226 = vand.u32 %v225, 4294901760
    %v227 = vsub.f32 %v225, %v226
    %v228 = vand.u32 %v227, 4294901760
    %229 = vmatpush1.msra.mxu0 %v228
    %230 = vmatprep.subr.mxu0 0.0
    %v231 = vand.u32 %v81, 4294901760
    %v232 = vsub.f32 %v81, %v231
    %v233 = vand.u32 %v232, 4294901760
    %v234 = vsub.f32 %v232, %v233
    %v235 = vand.u32 %v234, 4294901760
    %236 = vmatpush1.msra.mxu0 %v235
    %237 = vmatprep.subr.mxu0 0.0
    %v238 = vand.u32 %v82, 4294901760
    %v239 = vsub.f32 %v82, %v238
    %v240 = vand.u32 %v239, 4294901760
    %v241 = vsub.f32 %v239, %v240
    %v242 = vand.u32 %v241, 4294901760
    %243 = vmatpush1.msra.mxu0 %v242
    %244 = vmatprep.subr.mxu0 0.0
    %v245 = vand.u32 %v83, 4294901760
    %v246 = vsub.f32 %v83, %v245
    %v247 = vand.u32 %v246, 4294901760
    %v248 = vsub.f32 %v246, %v247
    %v249 = vand.u32 %v248, 4294901760
    %250 = vmatpush1.msra.mxu0 %v249
    %251 = vmatprep.subr.mxu0 0.0
    %v252 = vand.u32 %v84, 4294901760
    %v253 = vsub.f32 %v84, %v252
    %v254 = vand.u32 %v253, 4294901760
    %v255 = vsub.f32 %v253, %v254
    %v256 = vand.u32 %v255, 4294901760
    %257 = vmatpush1.msra.mxu0 %v256
    %258 = vmatprep.subr.mxu0 0.0
    %v259 = vand.u32 %v85, 4294901760
    %v260 = vsub.f32 %v85, %v259
    %v261 = vand.u32 %v260, 4294901760
    %v262 = vsub.f32 %v260, %v261
    %v263 = vand.u32 %v262, 4294901760
    %264 = vmatpush1.msra.mxu0 %v263
    %265 = vmatprep.subr.mxu0 0.0
    %v266 = vand.u32 %v86, 4294901760
    %v267 = vsub.f32 %v86, %v266
    %v268 = vand.u32 %v267, 4294901760
    %v269 = vsub.f32 %v267, %v268
    %v270 = vand.u32 %v269, 4294901760
    %271 = vmatpush1.msra.mxu0 %v270
    %272 = vmatprep.subr.mxu0 0.0
    %v273 = vand.u32 %v87, 4294901760
    %v274 = vsub.f32 %v87, %v273
    %v275 = vand.u32 %v274, 4294901760
    %v276 = vsub.f32 %v274, %v275
    %v277 = vand.u32 %v276, 4294901760
    %278 = vmatpush1.msra.mxu0 %v277
    %279 = vmatprep.subr.mxu0 0.0
    %v280 = vand.u32 %v88, 4294901760
    %v281 = vsub.f32 %v88, %v280
    %v282 = vand.u32 %v281, 4294901760
    %v283 = vsub.f32 %v281, %v282
    %v284 = vand.u32 %v283, 4294901760
    %285 = vmatpush1.msra.mxu0 %v284
    %286 = vmatprep.subr.mxu0 0.0
    %v287 = vand.u32 %v89, 4294901760
    %v288 = vsub.f32 %v89, %v287
    %v289 = vand.u32 %v288, 4294901760
    %v290 = vsub.f32 %v288, %v289
    %v291 = vand.u32 %v290, 4294901760
    %292 = vmatpush1.msra.mxu0 %v291
    %293 = vmatprep.subr.mxu0 0.0
    %294 = vmatpush1.msra.mxu0 0.0
    %295 = vmatprep.subr.mxu0 0.0
    %296 = vmatpush1.msra.mxu0 0.0
    %297 = vmatprep.subr.mxu0 0.0
    %298 = vmatpush1.msra.mxu0 0.0
    %299 = vmatprep.subr.mxu0 0.0
    %300 = vmatpush1.msra.mxu0 0.0
    %301 = vmatprep.subr.mxu0 0.0
    %302 = vmatpush1.msra.mxu0 0.0
    %303 = vmatprep.subr.mxu0 0.0
    %304 = vmatpush1.msra.mxu0 0.0
    %305 = vmatprep.subr.mxu0 0.0
    %306 = vmatpush1.msra.mxu0 0.0
    %307 = vmatprep.subr.mxu0 0.0
    %308 = vmatpush1.msra.mxu0 0.0
    %309 = vmatprep.subr.mxu0 0.0
    %310 = vmatpush1.msra.mxu0 0.0
    %311 = vmatprep.subr.mxu0 0.0
    %312 = vmatpush1.msra.mxu0 0.0
    %313 = vmatprep.subr.mxu0 0.0
    %314 = vmatpush1.msra.mxu0 0.0
    %315 = vmatprep.subr.mxu0 0.0
    %316 = vmatpush1.msra.mxu0 0.0
    %317 = vmatprep.subr.mxu0 0.0
    %318 = vmatpush1.msra.mxu0 0.0
    %319 = vmatprep.subr.mxu0 0.0
    %320 = vmatpush1.msra.mxu0 0.0
    %321 = vmatprep.subr.mxu0 0.0
    %322 = vmatpush1.msra.mxu0 0.0
    %323 = vmatprep.subr.mxu0 0.0
    %324 = vmatpush1.msra.mxu0 0.0
    %325 = vmatprep.mubr.f32.mxu0 0.0
    %v326 = vand.u32 %v73, 4294901760
    %327 = vmatmul.mubr.f32.gmra.mrb[0].mxu0 %v326
    %v328 = vpop.f32.mrb[0].mxu0
    %v329 = vadd.f32 %v178, %v328
    %v330 = vpop.f32.mrb[0].mxu0
    %331 = vdwg.mxu0
    %332 = vmatprep.subr.mxu0 0.0
    %v333 = vand.u32 %v74, 4294901760
    %v334 = vsub.f32 %v74, %v333
    %335 = vmatpush1.msra.mxu0 %v334
    %336 = vmatprep.subr.mxu0 0.0
    %v337 = vand.u32 %v75, 4294901760
    %v338 = vsub.f32 %v75, %v337
    %339 = vmatpush1.msra.mxu0 %v338
    %340 = vmatprep.subr.mxu0 0.0
    %v341 = vand.u32 %v76, 4294901760
    %v342 = vsub.f32 %v76, %v341
    %343 = vmatpush1.msra.mxu0 %v342
    %344 = vmatprep.subr.mxu0 0.0
    %v345 = vand.u32 %v77, 4294901760
    %v346 = vsub.f32 %v77, %v345
    %347 = vmatpush1.msra.mxu0 %v346
    %348 = vmatprep.subr.mxu0 0.0
    %v349 = vand.u32 %v78, 4294901760
    %v350 = vsub.f32 %v78, %v349
    %351 = vmatpush1.msra.mxu0 %v350
    %352 = vmatprep.subr.mxu0 0.0
    %v353 = vand.u32 %v79, 4294901760
    %v354 = vsub.f32 %v79, %v353
    %355 = vmatpush1.msra.mxu0 %v354
    %356 = vmatprep.subr.mxu0 0.0
    %v357 = vand.u32 %v80, 4294901760
    %v358 = vsub.f32 %v80, %v357
    %359 = vmatpush1.msra.mxu0 %v358
    %360 = vmatprep.subr.mxu0 0.0
    %v361 = vand.u32 %v81, 4294901760
    %v362 = vsub.f32 %v81, %v361
    %363 = vmatpush1.msra.mxu0 %v362
    %364 = vmatprep.subr.mxu0 0.0
    %v365 = vand.u32 %v82, 4294901760
    %v366 = vsub.f32 %v82, %v365
    %367 = vmatpush1.msra.mxu0 %v366
    %368 = vmatprep.subr.mxu0 0.0
    %v369 = vand.u32 %v83, 4294901760
    %v370 = vsub.f32 %v83, %v369
    %371 = vmatpush1.msra.mxu0 %v370
    %372 = vmatprep.subr.mxu0 0.0
    %v373 = vand.u32 %v84, 4294901760
    %v374 = vsub.f32 %v84, %v373
    %375 = vmatpush1.msra.mxu0 %v374
    %376 = vmatprep.subr.mxu0 0.0
    %v377 = vand.u32 %v85, 4294901760
    %v378 = vsub.f32 %v85, %v377
    %379 = vmatpush1.msra.mxu0 %v378
    %380 = vmatprep.subr.mxu0 0.0
    %v381 = vand.u32 %v86, 4294901760
    %v382 = vsub.f32 %v86, %v381
    %383 = vmatpush1.msra.mxu0 %v382
    %384 = vmatprep.subr.mxu0 0.0
    %v385 = vand.u32 %v87, 4294901760
    %v386 = vsub.f32 %v87, %v385
    %387 = vmatpush1.msra.mxu0 %v386
    %388 = vmatprep.subr.mxu0 0.0
    %v389 = vand.u32 %v88, 4294901760
    %v390 = vsub.f32 %v88, %v389
    %391 = vmatpush1.msra.mxu0 %v390
    %392 = vmatprep.subr.mxu0 0.0
    %v393 = vand.u32 %v89, 4294901760
    %v394 = vsub.f32 %v89, %v393
    %395 = vmatpush1.msra.mxu0 %v394
    %396 = vmatprep.subr.mxu0 0.0
    %397 = vmatpush1.msra.mxu0 0.0
    %398 = vmatprep.subr.mxu0 0.0
    %399 = vmatpush1.msra.mxu0 0.0
    %400 = vmatprep.subr.mxu0 0.0
    %401 = vmatpush1.msra.mxu0 0.0
    %402 = vmatprep.subr.mxu0 0.0
    %403 = vmatpush1.msra.mxu0 0.0
    %404 = vmatprep.subr.mxu0 0.0
    %405 = vmatpush1.msra.mxu0 0.0
    %406 = vmatprep.subr.mxu0 0.0
    %407 = vmatpush1.msra.mxu0 0.0
    %408 = vmatprep.subr.mxu0 0.0
    %409 = vmatpush1.msra.mxu0 0.0
    %410 = vmatprep.subr.mxu0 0.0
    %411 = vmatpush1.msra.mxu0 0.0
    %412 = vmatprep.subr.mxu0 0.0
    %413 = vmatpush1.msra.mxu0 0.0
    %414 = vmatprep.subr.mxu0 0.0
    %415 = vmatpush1.msra.mxu0 0.0
    %416 = vmatprep.subr.mxu0 0.0
    %417 = vmatpush1.msra.mxu0 0.0
    %418 = vmatprep.subr.mxu0 0.0
    %419 = vmatpush1.msra.mxu0 0.0
    %420 = vmatprep.subr.mxu0 0.0
    %421 = vmatpush1.msra.mxu0 0.0
    %422 = vmatprep.subr.mxu0 0.0
    %423 = vmatpush1.msra.mxu0 0.0
    %424 = vmatprep.subr.mxu0 0.0
    %425 = vmatpush1.msra.mxu0 0.0
    %426 = vmatprep.subr.mxu0 0.0
    %427 = vmatpush1.msra.mxu0 0.0
    %428 = vmatprep.mubr.f32.mxu0 0.0
    %v429 = vand.u32 %v73, 4294901760
    %v430 = vsub.f32 %v73, %v429
    %431 = vmatmul.mubr.f32.gmra.mrb[0].mxu0 %v430
    %v432 = vpop.f32.mrb[0].mxu0
    %v433 = vadd.f32 %v329, %v432
    %v434 = vpop.f32.mrb[0].mxu0
    %435 = vdwg.mxu0
    %436 = vmatprep.subr.mxu0 0.0
    %v437 = vand.u32 %v74, 4294901760
    %438 = vmatpush1.msra.mxu0 %v437
    %439 = vmatprep.subr.mxu0 0.0
    %v440 = vand.u32 %v75, 4294901760
    %441 = vmatpush1.msra.mxu0 %v440
    %442 = vmatprep.subr.mxu0 0.0
    %v443 = vand.u32 %v76, 4294901760
    %444 = vmatpush1.msra.mxu0 %v443
    %445 = vmatprep.subr.mxu0 0.0
    %v446 = vand.u32 %v77, 4294901760
    %447 = vmatpush1.msra.mxu0 %v446
    %448 = vmatprep.subr.mxu0 0.0
    %v449 = vand.u32 %v78, 4294901760
    %450 = vmatpush1.msra.mxu0 %v449
    %451 = vmatprep.subr.mxu0 0.0
    %v452 = vand.u32 %v79, 4294901760
    %453 = vmatpush1.msra.mxu0 %v452
    %454 = vmatprep.subr.mxu0 0.0
    %v455 = vand.u32 %v80, 4294901760
    %456 = vmatpush1.msra.mxu0 %v455
    %457 = vmatprep.subr.mxu0 0.0
    %v458 = vand.u32 %v81, 4294901760
    %459 = vmatpush1.msra.mxu0 %v458
    %460 = vmatprep.subr.mxu0 0.0
    %v461 = vand.u32 %v82, 4294901760
    %462 = vmatpush1.msra.mxu0 %v461
    %463 = vmatprep.subr.mxu0 0.0
    %v464 = vand.u32 %v83, 4294901760
    %465 = vmatpush1.msra.mxu0 %v464
    %466 = vmatprep.subr.mxu0 0.0
    %v467 = vand.u32 %v84, 4294901760
    %468 = vmatpush1.msra.mxu0 %v467
    %469 = vmatprep.subr.mxu0 0.0
    %v470 = vand.u32 %v85, 4294901760
    %471 = vmatpush1.msra.mxu0 %v470
    %472 = vmatprep.subr.mxu0 0.0
    %v473 = vand.u32 %v86, 4294901760
    %474 = vmatpush1.msra.mxu0 %v473
    %475 = vmatprep.subr.mxu0 0.0
    %v476 = vand.u32 %v87, 4294901760
    %477 = vmatpush1.msra.mxu0 %v476
    %478 = vmatprep.subr.mxu0 0.0
    %v479 = vand.u32 %v88, 4294901760
    %480 = vmatpush1.msra.mxu0 %v479
    %481 = vmatprep.subr.mxu0 0.0
    %v482 = vand.u32 %v89, 4294901760
    %483 = vmatpush1.msra.mxu0 %v482
    %484 = vmatprep.subr.mxu0 0.0
    %485 = vmatpush1.msra.mxu0 0.0
    %486 = vmatprep.subr.mxu0 0.0
    %487 = vmatpush1.msra.mxu0 0.0
    %488 = vmatprep.subr.mxu0 0.0
    %489 = vmatpush1.msra.mxu0 0.0
    %490 = vmatprep.subr.mxu0 0.0
    %491 = vmatpush1.msra.mxu0 0.0
    %492 = vmatprep.subr.mxu0 0.0
    %493 = vmatpush1.msra.mxu0 0.0
    %494 = vmatprep.subr.mxu0 0.0
    %495 = vmatpush1.msra.mxu0 0.0
    %496 = vmatprep.subr.mxu0 0.0
    %497 = vmatpush1.msra.mxu0 0.0
    %498 = vmatprep.subr.mxu0 0.0
    %499 = vmatpush1.msra.mxu0 0.0
    %500 = vmatprep.subr.mxu0 0.0
    %501 = vmatpush1.msra.mxu0 0.0
    %502 = vmatprep.subr.mxu0 0.0
    %503 = vmatpush1.msra.mxu0 0.0
    %504 = vmatprep.subr.mxu0 0.0
    %505 = vmatpush1.msra.mxu0 0.0
    %506 = vmatprep.subr.mxu0 0.0
    %507 = vmatpush1.msra.mxu0 0.0
    %508 = vmatprep.subr.mxu0 0.0
    %509 = vmatpush1.msra.mxu0 0.0
    %510 = vmatprep.subr.mxu0 0.0
    %511 = vmatpush1.msra.mxu0 0.0
    %512 = vmatprep.subr.mxu0 0.0
    %513 = vmatpush1.msra.mxu0 0.0
    %514 = vmatprep.subr.mxu0 0.0
    %515 = vmatpush1.msra.mxu0 0.0
    %516 = vmatprep.mubr.f32.mxu0 0.0
    %v517 = vand.u32 %v73, 4294901760
    %v518 = vsub.f32 %v73, %v517
    %v519 = vand.u32 %v518, 4294901760
    %520 = vmatmul.mubr.f32.gmra.mrb[0].mxu0 %v519
    %v521 = vpop.f32.mrb[0].mxu0
    %v522 = vadd.f32 %v433, %v521
    %v523 = vpop.f32.mrb[0].mxu0
    %524 = vdwg.mxu0
    %525 = vmatprep.subr.mxu0 0.0
    %v526 = vand.u32 %v74, 4294901760
    %v527 = vsub.f32 %v74, %v526
    %v528 = vand.u32 %v527, 4294901760
    %529 = vmatpush1.msra.mxu0 %v528
    %530 = vmatprep.subr.mxu0 0.0
    %v531 = vand.u32 %v75, 4294901760
    %v532 = vsub.f32 %v75, %v531
    %v533 = vand.u32 %v532, 4294901760
    %534 = vmatpush1.msra.mxu0 %v533
    %535 = vmatprep.subr.mxu0 0.0
    %v536 = vand.u32 %v76, 4294901760
    %v537 = vsub.f32 %v76, %v536
    %v538 = vand.u32 %v537, 4294901760
    %539 = vmatpush1.msra.mxu0 %v538
    %540 = vmatprep.subr.mxu0 0.0
    %v541 = vand.u32 %v77, 4294901760
    %v542 = vsub.f32 %v77, %v541
    %v543 = vand.u32 %v542, 4294901760
    %544 = vmatpush1.msra.mxu0 %v543
    %545 = vmatprep.subr.mxu0 0.0
    %v546 = vand.u32 %v78, 4294901760
    %v547 = vsub.f32 %v78, %v546
    %v548 = vand.u32 %v547, 4294901760
    %549 = vmatpush1.msra.mxu0 %v548
    %550 = vmatprep.subr.mxu0 0.0
    %v551 = vand.u32 %v79, 4294901760
    %v552 = vsub.f32 %v79, %v551
    %v553 = vand.u32 %v552, 4294901760
    %554 = vmatpush1.msra.mxu0 %v553
    %555 = vmatprep.subr.mxu0 0.0
    %v556 = vand.u32 %v80, 4294901760
    %v557 = vsub.f32 %v80, %v556
    %v558 = vand.u32 %v557, 4294901760
    %559 = vmatpush1.msra.mxu0 %v558
    %560 = vmatprep.subr.mxu0 0.0
    %v561 = vand.u32 %v81, 4294901760
    %v562 = vsub.f32 %v81, %v561
    %v563 = vand.u32 %v562, 4294901760
    %564 = vmatpush1.msra.mxu0 %v563
    %565 = vmatprep.subr.mxu0 0.0
    %v566 = vand.u32 %v82, 4294901760
    %v567 = vsub.f32 %v82, %v566
    %v568 = vand.u32 %v567, 4294901760
    %569 = vmatpush1.msra.mxu0 %v568
    %570 = vmatprep.subr.mxu0 0.0
    %v571 = vand.u32 %v83, 4294901760
    %v572 = vsub.f32 %v83, %v571
    %v573 = vand.u32 %v572, 4294901760
    %574 = vmatpush1.msra.mxu0 %v573
    %575 = vmatprep.subr.mxu0 0.0
    %v576 = vand.u32 %v84, 4294901760
    %v577 = vsub.f32 %v84, %v576
    %v578 = vand.u32 %v577, 4294901760
    %579 = vmatpush1.msra.mxu0 %v578
    %580 = vmatprep.subr.mxu0 0.0
    %v581 = vand.u32 %v85, 4294901760
    %v582 = vsub.f32 %v85, %v581
    %v583 = vand.u32 %v582, 4294901760
    %584 = vmatpush1.msra.mxu0 %v583
    %585 = vmatprep.subr.mxu0 0.0
    %v586 = vand.u32 %v86, 4294901760
    %v587 = vsub.f32 %v86, %v586
    %v588 = vand.u32 %v587, 4294901760
    %589 = vmatpush1.msra.mxu0 %v588
    %590 = vmatprep.subr.mxu0 0.0
    %v591 = vand.u32 %v87, 4294901760
    %v592 = vsub.f32 %v87, %v591
    %v593 = vand.u32 %v592, 4294901760
    %594 = vmatpush1.msra.mxu0 %v593
    %595 = vmatprep.subr.mxu0 0.0
    %v596 = vand.u32 %v88, 4294901760
    %v597 = vsub.f32 %v88, %v596
    %v598 = vand.u32 %v597, 4294901760
    %599 = vmatpush1.msra.mxu0 %v598
    %600 = vmatprep.subr.mxu0 0.0
    %v601 = vand.u32 %v89, 4294901760
    %v602 = vsub.f32 %v89, %v601
    %v603 = vand.u32 %v602, 4294901760
    %604 = vmatpush1.msra.mxu0 %v603
    %605 = vmatprep.subr.mxu0 0.0
    %606 = vmatpush1.msra.mxu0 0.0
    %607 = vmatprep.subr.mxu0 0.0
    %608 = vmatpush1.msra.mxu0 0.0
    %609 = vmatprep.subr.mxu0 0.0
    %610 = vmatpush1.msra.mxu0 0.0
    %611 = vmatprep.subr.mxu0 0.0
    %612 = vmatpush1.msra.mxu0 0.0
    %613 = vmatprep.subr.mxu0 0.0
    %614 = vmatpush1.msra.mxu0 0.0
    %615 = vmatprep.subr.mxu0 0.0
    %616 = vmatpush1.msra.mxu0 0.0
    %617 = vmatprep.subr.mxu0 0.0
    %618 = vmatpush1.msra.mxu0 0.0
    %619 = vmatprep.subr.mxu0 0.0
    %620 = vmatpush1.msra.mxu0 0.0
    %621 = vmatprep.subr.mxu0 0.0
    %622 = vmatpush1.msra.mxu0 0.0
    %623 = vmatprep.subr.mxu0 0.0
    %624 = vmatpush1.msra.mxu0 0.0
    %625 = vmatprep.subr.mxu0 0.0
    %626 = vmatpush1.msra.mxu0 0.0
    %627 = vmatprep.subr.mxu0 0.0
    %628 = vmatpush1.msra.mxu0 0.0
    %629 = vmatprep.subr.mxu0 0.0
    %630 = vmatpush1.msra.mxu0 0.0
    %631 = vmatprep.subr.mxu0 0.0
    %632 = vmatpush1.msra.mxu0 0.0
    %633 = vmatprep.subr.mxu0 0.0
    %634 = vmatpush1.msra.mxu0 0.0
    %635 = vmatprep.subr.mxu0 0.0
    %636 = vmatpush1.msra.mxu0 0.0
    %637 = vmatprep.mubr.f32.mxu0 0.0
    %v638 = vand.u32 %v73, 4294901760
    %639 = vmatmul.mubr.f32.gmra.mrb[0].mxu0 %v638
    %v640 = vpop.f32.mrb[0].mxu0
    %v641 = vadd.f32 %v522, %v640
    %v642 = vpop.f32.mrb[0].mxu0
    %643 = vdwg.mxu0
    %644 = vmatprep.subr.mxu0 0.0
    %v645 = vand.u32 %v74, 4294901760
    %646 = vmatpush1.msra.mxu0 %v645
    %647 = vmatprep.subr.mxu0 0.0
    %v648 = vand.u32 %v75, 4294901760
    %649 = vmatpush1.msra.mxu0 %v648
    %650 = vmatprep.subr.mxu0 0.0
    %v651 = vand.u32 %v76, 4294901760
    %652 = vmatpush1.msra.mxu0 %v651
    %653 = vmatprep.subr.mxu0 0.0
    %v654 = vand.u32 %v77, 4294901760
    %655 = vmatpush1.msra.mxu0 %v654
    %656 = vmatprep.subr.mxu0 0.0
    %v657 = vand.u32 %v78, 4294901760
    %658 = vmatpush1.msra.mxu0 %v657
    %659 = vmatprep.subr.mxu0 0.0
    %v660 = vand.u32 %v79, 4294901760
    %661 = vmatpush1.msra.mxu0 %v660
    %662 = vmatprep.subr.mxu0 0.0
    %v663 = vand.u32 %v80, 4294901760
    %664 = vmatpush1.msra.mxu0 %v663
    %665 = vmatprep.subr.mxu0 0.0
    %v666 = vand.u32 %v81, 4294901760
    %667 = vmatpush1.msra.mxu0 %v666
    %668 = vmatprep.subr.mxu0 0.0
    %v669 = vand.u32 %v82, 4294901760
    %670 = vmatpush1.msra.mxu0 %v669
    %671 = vmatprep.subr.mxu0 0.0
    %v672 = vand.u32 %v83, 4294901760
    %673 = vmatpush1.msra.mxu0 %v672
    %674 = vmatprep.subr.mxu0 0.0
    %v675 = vand.u32 %v84, 4294901760
    %676 = vmatpush1.msra.mxu0 %v675
    %677 = vmatprep.subr.mxu0 0.0
    %v678 = vand.u32 %v85, 4294901760
    %679 = vmatpush1.msra.mxu0 %v678
    %680 = vmatprep.subr.mxu0 0.0
    %v681 = vand.u32 %v86, 4294901760
    %682 = vmatpush1.msra.mxu0 %v681
    %683 = vmatprep.subr.mxu0 0.0
    %v684 = vand.u32 %v87, 4294901760
    %685 = vmatpush1.msra.mxu0 %v684
    %686 = vmatprep.subr.mxu0 0.0
    %v687 = vand.u32 %v88, 4294901760
    %688 = vmatpush1.msra.mxu0 %v687
    %689 = vmatprep.subr.mxu0 0.0
    %v690 = vand.u32 %v89, 4294901760
    %691 = vmatpush1.msra.mxu0 %v690
    %692 = vmatprep.subr.mxu0 0.0
    %693 = vmatpush1.msra.mxu0 0.0
    %694 = vmatprep.subr.mxu0 0.0
    %695 = vmatpush1.msra.mxu0 0.0
    %696 = vmatprep.subr.mxu0 0.0
    %697 = vmatpush1.msra.mxu0 0.0
    %698 = vmatprep.subr.mxu0 0.0
    %699 = vmatpush1.msra.mxu0 0.0
    %700 = vmatprep.subr.mxu0 0.0
    %701 = vmatpush1.msra.mxu0 0.0
    %702 = vmatprep.subr.mxu0 0.0
    %703 = vmatpush1.msra.mxu0 0.0
    %704 = vmatprep.subr.mxu0 0.0
    %705 = vmatpush1.msra.mxu0 0.0
    %706 = vmatprep.subr.mxu0 0.0
    %707 = vmatpush1.msra.mxu0 0.0
    %708 = vmatprep.subr.mxu0 0.0
    %709 = vmatpush1.msra.mxu0 0.0
    %710 = vmatprep.subr.mxu0 0.0
    %711 = vmatpush1.msra.mxu0 0.0
    %712 = vmatprep.subr.mxu0 0.0
    %713 = vmatpush1.msra.mxu0 0.0
    %714 = vmatprep.subr.mxu0 0.0
    %715 = vmatpush1.msra.mxu0 0.0
    %716 = vmatprep.subr.mxu0 0.0
    %717 = vmatpush1.msra.mxu0 0.0
    %718 = vmatprep.subr.mxu0 0.0
    %719 = vmatpush1.msra.mxu0 0.0
    %720 = vmatprep.subr.mxu0 0.0
    %721 = vmatpush1.msra.mxu0 0.0
    %722 = vmatprep.subr.mxu0 0.0
    %723 = vmatpush1.msra.mxu0 0.0
    %724 = vmatprep.mubr.f32.mxu0 0.0
    %v725 = vand.u32 %v73, 4294901760
    %726 = vmatmul.mubr.f32.gmra.mrb[0].mxu0 %v725
    %v727 = vpop.f32.mrb[0].mxu0
    %v728 = vadd.f32 %v641, %v727
    %v729 = vpop.f32.mrb[0].mxu0
    %730 = vdwg.mxu0
    %v731 = vmul.f32 %v728, 0.25
    %v732 = vadd.f32 %v731, 0.01
    %v733 = vrsqrt.pop %v732
    %v734 = vmul.f32 %v72, %v733
    %735 = vst [vmem:[#allocation10] sm:$0xff] %v734
    %v736 = vld [vmem:[#allocation5] sm:$0xf]
    %v737 = vld [vmem:[#allocation8] sm:$0xff]
    %v738 = vld [vmem:[#allocation8 + $0x8] sm:$0xff]
    %v739 = vld [vmem:[#allocation8 + $0x10] sm:$0xff]
    %v740 = vld [vmem:[#allocation8 + $0x18] sm:$0xff]
    %v741 = vld [vmem:[#allocation8 + $0x20] sm:$0xff]
    %v742 = vld [vmem:[#allocation8 + $0x28] sm:$0xff]
    %v743 = vld [vmem:[#allocation8 + $0x30] sm:$0xff]
    %v744 = vld [vmem:[#allocation8 + $0x38] sm:$0xff]
    %v745 = vld [vmem:[#allocation8 + $0x40] sm:$0xff]
    %v746 = vld [vmem:[#allocation8 + $0x48] sm:$0xff]
    %v747 = vld [vmem:[#allocation8 + $0x50] sm:$0xff]
    %v748 = vld [vmem:[#allocation8 + $0x58] sm:$0xff]
    %v749 = vld [vmem:[#allocation8 + $0x60] sm:$0xff]
    %v750 = vld [vmem:[#allocation8 + $0x68] sm:$0xff]
    %v751 = vld [vmem:[#allocation8 + $0x70] sm:$0xff]
    %v752 = vld [vmem:[#allocation8 + $0x78] sm:$0xff]
    %753 = vmatprep.subr.mxu0 0.0
    %v754 = vand.u32 %v737, 4294901760
    %755 = vmatpush1.msra.mxu0 %v754
    %756 = vmatprep.subr.mxu0 0.0
    %v757 = vand.u32 %v738, 4294901760
    %758 = vmatpush1.msra.mxu0 %v757
    %759 = vmatprep.subr.mxu0 0.0
    %v760 = vand.u32 %v739, 4294901760
    %761 = vmatpush1.msra.mxu0 %v760
    %762 = vmatprep.subr.mxu0 0.0
    %v763 = vand.u32 %v740, 4294901760
    %764 = vmatpush1.msra.mxu0 %v763
    %765 = vmatprep.subr.mxu0 0.0
    %v766 = vand.u32 %v741, 4294901760
    %767 = vmatpush1.msra.mxu0 %v766
    %768 = vmatprep.subr.mxu0 0.0
    %v769 = vand.u32 %v742, 4294901760
    %770 = vmatpush1.msra.mxu0 %v769
    %771 = vmatprep.subr.mxu0 0.0
    %v772 = vand.u32 %v743, 4294901760
    %773 = vmatpush1.msra.mxu0 %v772
    %774 = vmatprep.subr.mxu0 0.0
    %v775 = vand.u32 %v744, 4294901760
    %776 = vmatpush1.msra.mxu0 %v775
    %777 = vmatprep.subr.mxu0 0.0
    %v778 = vand.u32 %v745, 4294901760
    %779 = vmatpush1.msra.mxu0 %v778
    %780 = vmatprep.subr.mxu0 0.0
    %v781 = vand.u32 %v746, 4294901760
    %782 = vmatpush1.msra.mxu0 %v781
    %783 = vmatprep.subr.mxu0 0.0
    %v784 = vand.u32 %v747, 4294901760
    %785 = vmatpush1.msra.mxu0 %v784
    %786 = vmatprep.subr.mxu0 0.0
    %v787 = vand.u32 %v748, 4294901760
    %788 = vmatpush1.msra.mxu0 %v787
    %789 = vmatprep.subr.mxu0 0.0
    %v790 = vand.u32 %v749, 4294901760
    %791 = vmatpush1.msra.mxu0 %v790
    %792 = vmatprep.subr.mxu0 0.0
    %v793 = vand.u32 %v750, 4294901760
    %794 = vmatpush1.msra.mxu0 %v793
    %795 = vmatprep.subr.mxu0 0.0
    %v796 = vand.u32 %v751, 4294901760
    %797 = vmatpush1.msra.mxu0 %v796
    %798 = vmatprep.subr.mxu0 0.0
    %v799 = vand.u32 %v752, 4294901760
    %800 = vmatpush1.msra.mxu0 %v799
    %801 = vmatprep.subr.mxu0 0.0
    %802 = vmatpush1.msra.mxu0 0.0
    %803 = vmatprep.subr.mxu0 0.0
    %804 = vmatpush1.msra.mxu0 0.0
    %805 = vmatprep.subr.mxu0 0.0
    %806 = vmatpush1.msra.mxu0 0.0
    %807 = vmatprep.subr.mxu0 0.0
    %808 = vmatpush1.msra.mxu0 0.0
    %809 = vmatprep.subr.mxu0 0.0
    %810 = vmatpush1.msra.mxu0 0.0
    %811 = vmatprep.subr.mxu0 0.0
    %812 = vmatpush1.msra.mxu0 0.0
    %813 = vmatprep.subr.mxu0 0.0
    %814 = vmatpush1.msra.mxu0 0.0
    %815 = vmatprep.subr.mxu0 0.0
    %816 = vmatpush1.msra.mxu0 0.0
    %817 = vmatprep.subr.mxu0 0.0
    %818 = vmatpush1.msra.mxu0 0.0
    %819 = vmatprep.subr.mxu0 0.0
    %820 = vmatpush1.msra.mxu0 0.0
    %821 = vmatprep.subr.mxu0 0.0
    %822 = vmatpush1.msra.mxu0 0.0
    %823 = vmatprep.subr.mxu0 0.0
    %824 = vmatpush1.msra.mxu0 0.0
    %825 = vmatprep.subr.mxu0 0.0
    %826 = vmatpush1.msra.mxu0 0.0
    %827 = vmatprep.subr.mxu0 0.0
    %828 = vmatpush1.msra.mxu0 0.0
    %829 = vmatprep.subr.mxu0 0.0
    %830 = vmatpush1.msra.mxu0 0.0
    %831 = vmatprep.subr.mxu0 0.0
    %832 = vmatpush1.msra.mxu0 0.0
    %833 = vmatprep.mubr.f32.mxu0 0.0
    %v834 = vand.u32 %v736, 4294901760
    %v835 = vsub.f32 %v736, %v834
    %v836 = vand.u32 %v835, 4294901760
    %v837 = vsub.f32 %v835, %v836
    %v838 = vand.u32 %v837, 4294901760
    %839 = vmatmul.mubr.f32.gmra.mrb[0].mxu0 %v838
    %v840 = vpop.f32.mrb[0].mxu0
    %v841 = vadd.f32 0.0, %v840
    %v842 = vpop.f32.mrb[0].mxu0
    %843 = vdwg.mxu0
    %844 = vmatprep.subr.mxu0 0.0
    %v845 = vand.u32 %v737, 4294901760
    %v846 = vsub.f32 %v737, %v845
    %v847 = vand.u32 %v846, 4294901760
    %v848 = vsub.f32 %v846, %v847
    %v849 = vand.u32 %v848, 4294901760
    %850 = vmatpush1.msra.mxu0 %v849
    %851 = vmatprep.subr.mxu0 0.0
    %v852 = vand.u32 %v738, 4294901760
    %v853 = vsub.f32 %v738, %v852
    %v854 = vand.u32 %v853, 4294901760
    %v855 = vsub.f32 %v853, %v854
    %v856 = vand.u32 %v855, 4294901760
    %857 = vmatpush1.msra.mxu0 %v856
    %858 = vmatprep.subr.mxu0 0.0
    %v859 = vand.u32 %v739, 4294901760
    %v860 = vsub.f32 %v739, %v859
    %v861 = vand.u32 %v860, 4294901760
    %v862 = vsub.f32 %v860, %v861
    %v863 = vand.u32 %v862, 4294901760
    %864 = vmatpush1.msra.mxu0 %v863
    %865 = vmatprep.subr.mxu0 0.0
    %v866 = vand.u32 %v740, 4294901760
    %v867 = vsub.f32 %v740, %v866
    %v868 = vand.u32 %v867, 4294901760
    %v869 = vsub.f32 %v867, %v868
    %v870 = vand.u32 %v869, 4294901760
    %871 = vmatpush1.msra.mxu0 %v870
    %872 = vmatprep.subr.mxu0 0.0
    %v873 = vand.u32 %v741, 4294901760
    %v874 = vsub.f32 %v741, %v873
    %v875 = vand.u32 %v874, 4294901760
    %v876 = vsub.f32 %v874, %v875
    %v877 = vand.u32 %v876, 4294901760
    %878 = vmatpush1.msra.mxu0 %v877
    %879 = vmatprep.subr.mxu0 0.0
    %v880 = vand.u32 %v742, 4294901760
    %v881 = vsub.f32 %v742, %v880
    %v882 = vand.u32 %v881, 4294901760
    %v883 = vsub.f32 %v881, %v882
    %v884 = vand.u32 %v883, 4294901760
    %885 = vmatpush1.msra.mxu0 %v884
    %886 = vmatprep.subr.mxu0 0.0
    %v887 = vand.u32 %v743, 4294901760
    %v888 = vsub.f32 %v743, %v887
    %v889 = vand.u32 %v888, 4294901760
    %v890 = vsub.f32 %v888, %v889
    %v891 = vand.u32 %v890, 4294901760
    %892 = vmatpush1.msra.mxu0 %v891
    %893 = vmatprep.subr.mxu0 0.0
    %v894 = vand.u32 %v744, 4294901760
    %v895 = vsub.f32 %v744, %v894
    %v896 = vand.u32 %v895, 4294901760
    %v897 = vsub.f32 %v895, %v896
    %v898 = vand.u32 %v897, 4294901760
    %899 = vmatpush1.msra.mxu0 %v898
    %900 = vmatprep.subr.mxu0 0.0
    %v901 = vand.u32 %v745, 4294901760
    %v902 = vsub.f32 %v745, %v901
    %v903 = vand.u32 %v902, 4294901760
    %v904 = vsub.f32 %v902, %v903
    %v905 = vand.u32 %v904, 4294901760
    %906 = vmatpush1.msra.mxu0 %v905
    %907 = vmatprep.subr.mxu0 0.0
    %v908 = vand.u32 %v746, 4294901760
    %v909 = vsub.f32 %v746, %v908
    %v910 = vand.u32 %v909, 4294901760
    %v911 = vsub.f32 %v909, %v910
    %v912 = vand.u32 %v911, 4294901760
    %913 = vmatpush1.msra.mxu0 %v912
    %914 = vmatprep.subr.mxu0 0.0
    %v915 = vand.u32 %v747, 4294901760
    %v916 = vsub.f32 %v747, %v915
    %v917 = vand.u32 %v916, 4294901760
    %v918 = vsub.f32 %v916, %v917
    %v919 = vand.u32 %v918, 4294901760
    %920 = vmatpush1.msra.mxu0 %v919
    %921 = vmatprep.subr.mxu0 0.0
    %v922 = vand.u32 %v748, 4294901760
    %v923 = vsub.f32 %v748, %v922
    %v924 = vand.u32 %v923, 4294901760
    %v925 = vsub.f32 %v923, %v924
    %v926 = vand.u32 %v925, 4294901760
    %927 = vmatpush1.msra.mxu0 %v926
    %928 = vmatprep.subr.mxu0 0.0
    %v929 = vand.u32 %v749, 4294901760
    %v930 = vsub.f32 %v749, %v929
    %v931 = vand.u32 %v930, 4294901760
    %v932 = vsub.f32 %v930, %v931
    %v933 = vand.u32 %v932, 4294901760
    %934 = vmatpush1.msra.mxu0 %v933
    %935 = vmatprep.subr.mxu0 0.0
    %v936 = vand.u32 %v750, 4294901760
    %v937 = vsub.f32 %v750, %v936
    %v938 = vand.u32 %v937, 4294901760
    %v939 = vsub.f32 %v937, %v938
    %v940 = vand.u32 %v939, 4294901760
    %941 = vmatpush1.msra.mxu0 %v940
    %942 = vmatprep.subr.mxu0 0.0
    %v943 = vand.u32 %v751, 4294901760
    %v944 = vsub.f32 %v751, %v943
    %v945 = vand.u32 %v944, 4294901760
    %v946 = vsub.f32 %v944, %v945
    %v947 = vand.u32 %v946, 4294901760
    %948 = vmatpush1.msra.mxu0 %v947
    %949 = vmatprep.subr.mxu0 0.0
    %v950 = vand.u32 %v752, 4294901760
    %v951 = vsub.f32 %v752, %v950
    %v952 = vand.u32 %v951, 4294901760
    %v953 = vsub.f32 %v951, %v952
    %v954 = vand.u32 %v953, 4294901760
    %955 = vmatpush1.msra.mxu0 %v954
    %956 = vmatprep.subr.mxu0 0.0
    %957 = vmatpush1.msra.mxu0 0.0
    %958 = vmatprep.subr.mxu0 0.0
    %959 = vmatpush1.msra.mxu0 0.0
    %960 = vmatprep.subr.mxu0 0.0
    %961 = vmatpush1.msra.mxu0 0.0
    %962 = vmatprep.subr.mxu0 0.0
    %963 = vmatpush1.msra.mxu0 0.0
    %964 = vmatprep.subr.mxu0 0.0
    %965 = vmatpush1.msra.mxu0 0.0
    %966 = vmatprep.subr.mxu0 0.0
    %967 = vmatpush1.msra.mxu0 0.0
    %968 = vmatprep.subr.mxu0 0.0
    %969 = vmatpush1.msra.mxu0 0.0
    %970 = vmatprep.subr.mxu0 0.0
    %971 = vmatpush1.msra.mxu0 0.0
    %972 = vmatprep.subr.mxu0 0.0
    %973 = vmatpush1.msra.mxu0 0.0
    %974 = vmatprep.subr.mxu0 0.0
    %975 = vmatpush1.msra.mxu0 0.0
    %976 = vmatprep.subr.mxu0 0.0
    %977 = vmatpush1.msra.mxu0 0.0
    %978 = vmatprep.subr.mxu0 0.0
    %979 = vmatpush1.msra.mxu0 0.0
    %980 = vmatprep.subr.mxu0 0.0
    %981 = vmatpush1.msra.mxu0 0.0
    %982 = vmatprep.subr.mxu0 0.0
    %983 = vmatpush1.msra.mxu0 0.0
    %984 = vmatprep.subr.mxu0 0.0
    %985 = vmatpush1.msra.mxu0 0.0
    %986 = vmatprep.subr.mxu0 0.0
    %987 = vmatpush1.msra.mxu0 0.0
    %988 = vmatprep.mubr.f32.mxu0 0.0
    %v989 = vand.u32 %v736, 4294901760
    %990 = vmatmul.mubr.f32.gmra.mrb[0].mxu0 %v989
    %v991 = vpop.f32.mrb[0].mxu0
    %v992 = vadd.f32 %v841, %v991
    %v993 = vpop.f32.mrb[0].mxu0
    %994 = vdwg.mxu0
    %995 = vmatprep.subr.mxu0 0.0
    %v996 = vand.u32 %v737, 4294901760
    %v997 = vsub.f32 %v737, %v996
    %998 = vmatpush1.msra.mxu0 %v997
    %999 = vmatprep.subr.mxu0 0.0
    %v1000 = vand.u32 %v738, 4294901760
    %v1001 = vsub.f32 %v738, %v1000
    %1002 = vmatpush1.msra.mxu0 %v1001
    %1003 = vmatprep.subr.mxu0 0.0
    %v1004 = vand.u32 %v739, 4294901760
    %v1005 = vsub.f32 %v739, %v1004
    %1006 = vmatpush1.msra.mxu0 %v1005
    %1007 = vmatprep.subr.mxu0 0.0
    %v1008 = vand.u32 %v740, 4294901760
    %v1009 = vsub.f32 %v740, %v1008
    %1010 = vmatpush1.msra.mxu0 %v1009
    %1011 = vmatprep.subr.mxu0 0.0
    %v1012 = vand.u32 %v741, 4294901760
    %v1013 = vsub.f32 %v741, %v1012
    %1014 = vmatpush1.msra.mxu0 %v1013
    %1015 = vmatprep.subr.mxu0 0.0
    %v1016 = vand.u32 %v742, 4294901760
    %v1017 = vsub.f32 %v742, %v1016
    %1018 = vmatpush1.msra.mxu0 %v1017
    %1019 = vmatprep.subr.mxu0 0.0
    %v1020 = vand.u32 %v743, 4294901760
    %v1021 = vsub.f32 %v743, %v1020
    %1022 = vmatpush1.msra.mxu0 %v1021
    %1023 = vmatprep.subr.mxu0 0.0
    %v1024 = vand.u32 %v744, 4294901760
    %v1025 = vsub.f32 %v744, %v1024
    %1026 = vmatpush1.msra.mxu0 %v1025
    %1027 = vmatprep.subr.mxu0 0.0
    %v1028 = vand.u32 %v745, 4294901760
    %v1029 = vsub.f32 %v745, %v1028
    %1030 = vmatpush1.msra.mxu0 %v1029
    %1031 = vmatprep.subr.mxu0 0.0
    %v1032 = vand.u32 %v746, 4294901760
    %v1033 = vsub.f32 %v746, %v1032
    %1034 = vmatpush1.msra.mxu0 %v1033
    %1035 = vmatprep.subr.mxu0 0.0
    %v1036 = vand.u32 %v747, 4294901760
    %v1037 = vsub.f32 %v747, %v1036
    %1038 = vmatpush1.msra.mxu0 %v1037
    %1039 = vmatprep.subr.mxu0 0.0
    %v1040 = vand.u32 %v748, 4294901760
    %v1041 = vsub.f32 %v748, %v1040
    %1042 = vmatpush1.msra.mxu0 %v1041
    %1043 = vmatprep.subr.mxu0 0.0
    %v1044 = vand.u32 %v749, 4294901760
    %v1045 = vsub.f32 %v749, %v1044
    %1046 = vmatpush1.msra.mxu0 %v1045
    %1047 = vmatprep.subr.mxu0 0.0
    %v1048 = vand.u32 %v750, 4294901760
    %v1049 = vsub.f32 %v750, %v1048
    %1050 = vmatpush1.msra.mxu0 %v1049
    %1051 = vmatprep.subr.mxu0 0.0
    %v1052 = vand.u32 %v751, 4294901760
    %v1053 = vsub.f32 %v751, %v1052
    %1054 = vmatpush1.msra.mxu0 %v1053
    %1055 = vmatprep.subr.mxu0 0.0
    %v1056 = vand.u32 %v752, 4294901760
    %v1057 = vsub.f32 %v752, %v1056
    %1058 = vmatpush1.msra.mxu0 %v1057
    %1059 = vmatprep.subr.mxu0 0.0
    %1060 = vmatpush1.msra.mxu0 0.0
    %1061 = vmatprep.subr.mxu0 0.0
    %1062 = vmatpush1.msra.mxu0 0.0
    %1063 = vmatprep.subr.mxu0 0.0
    %1064 = vmatpush1.msra.mxu0 0.0
    %1065 = vmatprep.subr.mxu0 0.0
    %1066 = vmatpush1.msra.mxu0 0.0
    %1067 = vmatprep.subr.mxu0 0.0
    %1068 = vmatpush1.msra.mxu0 0.0
    %1069 = vmatprep.subr.mxu0 0.0
    %1070 = vmatpush1.msra.mxu0 0.0
    %1071 = vmatprep.subr.mxu0 0.0
    %1072 = vmatpush1.msra.mxu0 0.0
    %1073 = vmatprep.subr.mxu0 0.0
    %1074 = vmatpush1.msra.mxu0 0.0
    %1075 = vmatprep.subr.mxu0 0.0
    %1076 = vmatpush1.msra.mxu0 0.0
    %1077 = vmatprep.subr.mxu0 0.0
    %1078 = vmatpush1.msra.mxu0 0.0
    %1079 = vmatprep.subr.mxu0 0.0
    %1080 = vmatpush1.msra.mxu0 0.0
    %1081 = vmatprep.subr.mxu0 0.0
    %1082 = vmatpush1.msra.mxu0 0.0
    %1083 = vmatprep.subr.mxu0 0.0
    %1084 = vmatpush1.msra.mxu0 0.0
    %1085 = vmatprep.subr.mxu0 0.0
    %1086 = vmatpush1.msra.mxu0 0.0
    %1087 = vmatprep.subr.mxu0 0.0
    %1088 = vmatpush1.msra.mxu0 0.0
    %1089 = vmatprep.subr.mxu0 0.0
    %1090 = vmatpush1.msra.mxu0 0.0
    %1091 = vmatprep.mubr.f32.mxu0 0.0
    %v1092 = vand.u32 %v736, 4294901760
    %v1093 = vsub.f32 %v736, %v1092
    %1094 = vmatmul.mubr.f32.gmra.mrb[0].mxu0 %v1093
    %v1095 = vpop.f32.mrb[0].mxu0
    %v1096 = vadd.f32 %v992, %v1095
    %v1097 = vpop.f32.mrb[0].mxu0
    %1098 = vdwg.mxu0
    %1099 = vmatprep.subr.mxu0 0.0
    %v1100 = vand.u32 %v737, 4294901760
    %1101 = vmatpush1.msra.mxu0 %v1100
    %1102 = vmatprep.subr.mxu0 0.0
    %v1103 = vand.u32 %v738, 4294901760
    %1104 = vmatpush1.msra.mxu0 %v1103
    %1105 = vmatprep.subr.mxu0 0.0
    %v1106 = vand.u32 %v739, 4294901760
    %1107 = vmatpush1.msra.mxu0 %v1106
    %1108 = vmatprep.subr.mxu0 0.0
    %v1109 = vand.u32 %v740, 4294901760
    %1110 = vmatpush1.msra.mxu0 %v1109
    %1111 = vmatprep.subr.mxu0 0.0
    %v1112 = vand.u32 %v741, 4294901760
    %1113 = vmatpush1.msra.mxu0 %v1112
    %1114 = vmatprep.subr.mxu0 0.0
    %v1115 = vand.u32 %v742, 4294901760
    %1116 = vmatpush1.msra.mxu0 %v1115
    %1117 = vmatprep.subr.mxu0 0.0
    %v1118 = vand.u32 %v743, 4294901760
    %1119 = vmatpush1.msra.mxu0 %v1118
    %1120 = vmatprep.subr.mxu0 0.0
    %v1121 = vand.u32 %v744, 4294901760
    %1122 = vmatpush1.msra.mxu0 %v1121
    %1123 = vmatprep.subr.mxu0 0.0
    %v1124 = vand.u32 %v745, 4294901760
    %1125 = vmatpush1.msra.mxu0 %v1124
    %1126 = vmatprep.subr.mxu0 0.0
    %v1127 = vand.u32 %v746, 4294901760
    %1128 = vmatpush1.msra.mxu0 %v1127
    %1129 = vmatprep.subr.mxu0 0.0
    %v1130 = vand.u32 %v747, 4294901760
    %1131 = vmatpush1.msra.mxu0 %v1130
    %1132 = vmatprep.subr.mxu0 0.0
    %v1133 = vand.u32 %v748, 4294901760
    %1134 = vmatpush1.msra.mxu0 %v1133
    %1135 = vmatprep.subr.mxu0 0.0
    %v1136 = vand.u32 %v749, 4294901760
    %1137 = vmatpush1.msra.mxu0 %v1136
    %1138 = vmatprep.subr.mxu0 0.0
    %v1139 = vand.u32 %v750, 4294901760
    %1140 = vmatpush1.msra.mxu0 %v1139
    %1141 = vmatprep.subr.mxu0 0.0
    %v1142 = vand.u32 %v751, 4294901760
    %1143 = vmatpush1.msra.mxu0 %v1142
    %1144 = vmatprep.subr.mxu0 0.0
    %v1145 = vand.u32 %v752, 4294901760
    %1146 = vmatpush1.msra.mxu0 %v1145
    %1147 = vmatprep.subr.mxu0 0.0
    %1148 = vmatpush1.msra.mxu0 0.0
    %1149 = vmatprep.subr.mxu0 0.0
    %1150 = vmatpush1.msra.mxu0 0.0
    %1151 = vmatprep.subr.mxu0 0.0
    %1152 = vmatpush1.msra.mxu0 0.0
    %1153 = vmatprep.subr.mxu0 0.0
    %1154 = vmatpush1.msra.mxu0 0.0
    %1155 = vmatprep.subr.mxu0 0.0
    %1156 = vmatpush1.msra.mxu0 0.0
    %1157 = vmatprep.subr.mxu0 0.0
    %1158 = vmatpush1.msra.mxu0 0.0
    %1159 = vmatprep.subr.mxu0 0.0
    %1160 = vmatpush1.msra.mxu0 0.0
    %1161 = vmatprep.subr.mxu0 0.0
    %1162 = vmatpush1.msra.mxu0 0.0
    %1163 = vmatprep.subr.mxu0 0.0
    %1164 = vmatpush1.msra.mxu0 0.0
    %1165 = vmatprep.subr.mxu0 0.0
    %1166 = vmatpush1.msra.mxu0 0.0
    %1167 = vmatprep.subr.mxu0 0.0
    %1168 = vmatpush1.msra.mxu0 0.0
    %1169 = vmatprep.subr.mxu0 0.0
    %1170 = vmatpush1.msra.mxu0 0.0
    %1171 = vmatprep.subr.mxu0 0.0
    %1172 = vmatpush1.msra.mxu0 0.0
    %1173 = vmatprep.subr.mxu0 0.0
    %1174 = vmatpush1.msra.mxu0 0.0
    %1175 = vmatprep.subr.mxu0 0.0
    %1176 = vmatpush1.msra.mxu0 0.0
    %1177 = vmatprep.subr.mxu0 0.0
    %1178 = vmatpush1.msra.mxu0 0.0
    %1179 = vmatprep.mubr.f32.mxu0 0.0
    %v1180 = vand.u32 %v736, 4294901760
    %v1181 = vsub.f32 %v736, %v1180
    %v1182 = vand.u32 %v1181, 4294901760
    %1183 = vmatmul.mubr.f32.gmra.mrb[0].mxu0 %v1182
    %v1184 = vpop.f32.mrb[0].mxu0
    %v1185 = vadd.f32 %v1096, %v1184
    %v1186 = vpop.f32.mrb[0].mxu0
    %1187 = vdwg.mxu0
    %1188 = vmatprep.subr.mxu0 0.0
    %v1189 = vand.u32 %v737, 4294901760
    %v1190 = vsub.f32 %v737, %v1189
    %v1191 = vand.u32 %v1190, 4294901760
    %1192 = vmatpush1.msra.mxu0 %v1191
    %1193 = vmatprep.subr.mxu0 0.0
    %v1194 = vand.u32 %v738, 4294901760
    %v1195 = vsub.f32 %v738, %v1194
    %v1196 = vand.u32 %v1195, 4294901760
    %1197 = vmatpush1.msra.mxu0 %v1196
    %1198 = vmatprep.subr.mxu0 0.0
    %v1199 = vand.u32 %v739, 4294901760
    %v1200 = vsub.f32 %v739, %v1199
    %v1201 = vand.u32 %v1200, 4294901760
    %1202 = vmatpush1.msra.mxu0 %v1201
    %1203 = vmatprep.subr.mxu0 0.0
    %v1204 = vand.u32 %v740, 4294901760
    %v1205 = vsub.f32 %v740, %v1204
    %v1206 = vand.u32 %v1205, 4294901760
    %1207 = vmatpush1.msra.mxu0 %v1206
    %1208 = vmatprep.subr.mxu0 0.0
    %v1209 = vand.u32 %v741, 4294901760
    %v1210 = vsub.f32 %v741, %v1209
    %v1211 = vand.u32 %v1210, 4294901760
    %1212 = vmatpush1.msra.mxu0 %v1211
    %1213 = vmatprep.subr.mxu0 0.0
    %v1214 = vand.u32 %v742, 4294901760
    %v1215 = vsub.f32 %v742, %v1214
    %v1216 = vand.u32 %v1215, 4294901760
    %1217 = vmatpush1.msra.mxu0 %v1216
    %1218 = vmatprep.subr.mxu0 0.0
    %v1219 = vand.u32 %v743, 4294901760
    %v1220 = vsub.f32 %v743, %v1219
    %v1221 = vand.u32 %v1220, 4294901760
    %1222 = vmatpush1.msra.mxu0 %v1221
    %1223 = vmatprep.subr.mxu0 0.0
    %v1224 = vand.u32 %v744, 4294901760
    %v1225 = vsub.f32 %v744, %v1224
    %v1226 = vand.u32 %v1225, 4294901760
    %1227 = vmatpush1.msra.mxu0 %v1226
    %1228 = vmatprep.subr.mxu0 0.0
    %v1229 = vand.u32 %v745, 4294901760
    %v1230 = vsub.f32 %v745, %v1229
    %v1231 = vand.u32 %v1230, 4294901760
    %1232 = vmatpush1.msra.mxu0 %v1231
    %1233 = vmatprep.subr.mxu0 0.0
    %v1234 = vand.u32 %v746, 4294901760
    %v1235 = vsub.f32 %v746, %v1234
    %v1236 = vand.u32 %v1235, 4294901760
    %1237 = vmatpush1.msra.mxu0 %v1236
    %1238 = vmatprep.subr.mxu0 0.0
    %v1239 = vand.u32 %v747, 4294901760
    %v1240 = vsub.f32 %v747, %v1239
    %v1241 = vand.u32 %v1240, 4294901760
    %1242 = vmatpush1.msra.mxu0 %v1241
    %1243 = vmatprep.subr.mxu0 0.0
    %v1244 = vand.u32 %v748, 4294901760
    %v1245 = vsub.f32 %v748, %v1244
    %v1246 = vand.u32 %v1245, 4294901760
    %1247 = vmatpush1.msra.mxu0 %v1246
    %1248 = vmatprep.subr.mxu0 0.0
    %v1249 = vand.u32 %v749, 4294901760
    %v1250 = vsub.f32 %v749, %v1249
    %v1251 = vand.u32 %v1250, 4294901760
    %1252 = vmatpush1.msra.mxu0 %v1251
    %1253 = vmatprep.subr.mxu0 0.0
    %v1254 = vand.u32 %v750, 4294901760
    %v1255 = vsub.f32 %v750, %v1254
    %v1256 = vand.u32 %v1255, 4294901760
    %1257 = vmatpush1.msra.mxu0 %v1256
    %1258 = vmatprep.subr.mxu0 0.0
    %v1259 = vand.u32 %v751, 4294901760
    %v1260 = vsub.f32 %v751, %v1259
    %v1261 = vand.u32 %v1260, 4294901760
    %1262 = vmatpush1.msra.mxu0 %v1261
    %1263 = vmatprep.subr.mxu0 0.0
    %v1264 = vand.u32 %v752, 4294901760
    %v1265 = vsub.f32 %v752, %v1264
    %v1266 = vand.u32 %v1265, 4294901760
    %1267 = vmatpush1.msra.mxu0 %v1266
    %1268 = vmatprep.subr.mxu0 0.0
    %1269 = vmatpush1.msra.mxu0 0.0
    %1270 = vmatprep.subr.mxu0 0.0
    %1271 = vmatpush1.msra.mxu0 0.0
    %1272 = vmatprep.subr.mxu0 0.0
    %1273 = vmatpush1.msra.mxu0 0.0
    %1274 = vmatprep.subr.mxu0 0.0
    %1275 = vmatpush1.msra.mxu0 0.0
    %1276 = vmatprep.subr.mxu0 0.0
    %1277 = vmatpush1.msra.mxu0 0.0
    %1278 = vmatprep.subr.mxu0 0.0
    %1279 = vmatpush1.msra.mxu0 0.0
    %1280 = vmatprep.subr.mxu0 0.0
    %1281 = vmatpush1.msra.mxu0 0.0
    %1282 = vmatprep.subr.mxu0 0.0
    %1283 = vmatpush1.msra.mxu0 0.0
    %1284 = vmatprep.subr.mxu0 0.0
    %1285 = vmatpush1.msra.mxu0 0.0
    %1286 = vmatprep.subr.mxu0 0.0
    %1287 = vmatpush1.msra.mxu0 0.0
    %1288 = vmatprep.subr.mxu0 0.0
    %1289 = vmatpush1.msra.mxu0 0.0
    %1290 = vmatprep.subr.mxu0 0.0
    %1291 = vmatpush1.msra.mxu0 0.0
    %1292 = vmatprep.subr.mxu0 0.0
    %1293 = vmatpush1.msra.mxu0 0.0
    %1294 = vmatprep.subr.mxu0 0.0
    %1295 = vmatpush1.msra.mxu0 0.0
    %1296 = vmatprep.subr.mxu0 0.0
    %1297 = vmatpush1.msra.mxu0 0.0
    %1298 = vmatprep.subr.mxu0 0.0
    %1299 = vmatpush1.msra.mxu0 0.0
    %1300 = vmatprep.mubr.f32.mxu0 0.0
    %v1301 = vand.u32 %v736, 4294901760
    %1302 = vmatmul.mubr.f32.gmra.mrb[0].mxu0 %v1301
    %v1303 = vpop.f32.mrb[0].mxu0
    %v1304 = vadd.f32 %v1185, %v1303
    %v1305 = vpop.f32.mrb[0].mxu0
    %1306 = vdwg.mxu0
    %1307 = vmatprep.subr.mxu0 0.0
    %v1308 = vand.u32 %v737, 4294901760
    %1309 = vmatpush1.msra.mxu0 %v1308
    %1310 = vmatprep.subr.mxu0 0.0
    %v1311 = vand.u32 %v738, 4294901760
    %1312 = vmatpush1.msra.mxu0 %v1311
    %1313 = vmatprep.subr.mxu0 0.0
    %v1314 = vand.u32 %v739, 4294901760
    %1315 = vmatpush1.msra.mxu0 %v1314
    %1316 = vmatprep.subr.mxu0 0.0
    %v1317 = vand.u32 %v740, 4294901760
    %1318 = vmatpush1.msra.mxu0 %v1317
    %1319 = vmatprep.subr.mxu0 0.0
    %v1320 = vand.u32 %v741, 4294901760
    %1321 = vmatpush1.msra.mxu0 %v1320
    %1322 = vmatprep.subr.mxu0 0.0
    %v1323 = vand.u32 %v742, 4294901760
    %1324 = vmatpush1.msra.mxu0 %v1323
    %1325 = vmatprep.subr.mxu0 0.0
    %v1326 = vand.u32 %v743, 4294901760
    %1327 = vmatpush1.msra.mxu0 %v1326
    %1328 = vmatprep.subr.mxu0 0.0
    %v1329 = vand.u32 %v744, 4294901760
    %1330 = vmatpush1.msra.mxu0 %v1329
    %1331 = vmatprep.subr.mxu0 0.0
    %v1332 = vand.u32 %v745, 4294901760
    %1333 = vmatpush1.msra.mxu0 %v1332
    %1334 = vmatprep.subr.mxu0 0.0
    %v1335 = vand.u32 %v746, 4294901760
    %1336 = vmatpush1.msra.mxu0 %v1335
    %1337 = vmatprep.subr.mxu0 0.0
    %v1338 = vand.u32 %v747, 4294901760
    %1339 = vmatpush1.msra.mxu0 %v1338
    %1340 = vmatprep.subr.mxu0 0.0
    %v1341 = vand.u32 %v748, 4294901760
    %1342 = vmatpush1.msra.mxu0 %v1341
    %1343 = vmatprep.subr.mxu0 0.0
    %v1344 = vand.u32 %v749, 4294901760
    %1345 = vmatpush1.msra.mxu0 %v1344
    %1346 = vmatprep.subr.mxu0 0.0
    %v1347 = vand.u32 %v750, 4294901760
    %1348 = vmatpush1.msra.mxu0 %v1347
    %1349 = vmatprep.subr.mxu0 0.0
    %v1350 = vand.u32 %v751, 4294901760
    %1351 = vmatpush1.msra.mxu0 %v1350
    %1352 = vmatprep.subr.mxu0 0.0
    %v1353 = vand.u32 %v752, 4294901760
    %1354 = vmatpush1.msra.mxu0 %v1353
    %1355 = vmatprep.subr.mxu0 0.0
    %1356 = vmatpush1.msra.mxu0 0.0
    %1357 = vmatprep.subr.mxu0 0.0
    %1358 = vmatpush1.msra.mxu0 0.0
    %1359 = vmatprep.subr.mxu0 0.0
    %1360 = vmatpush1.msra.mxu0 0.0
    %1361 = vmatprep.subr.mxu0 0.0
    %1362 = vmatpush1.msra.mxu0 0.0
    %1363 = vmatprep.subr.mxu0 0.0
    %1364 = vmatpush1.msra.mxu0 0.0
    %1365 = vmatprep.subr.mxu0 0.0
    %1366 = vmatpush1.msra.mxu0 0.0
    %1367 = vmatprep.subr.mxu0 0.0
    %1368 = vmatpush1.msra.mxu0 0.0
    %1369 = vmatprep.subr.mxu0 0.0
    %1370 = vmatpush1.msra.mxu0 0.0
    %1371 = vmatprep.subr.mxu0 0.0
    %1372 = vmatpush1.msra.mxu0 0.0
    %1373 = vmatprep.subr.mxu0 0.0
    %1374 = vmatpush1.msra.mxu0 0.0
    %1375 = vmatprep.subr.mxu0 0.0
    %1376 = vmatpush1.msra.mxu0 0.0
    %1377 = vmatprep.subr.mxu0 0.0
    %1378 = vmatpush1.msra.mxu0 0.0
    %1379 = vmatprep.subr.mxu0 0.0
    %1380 = vmatpush1.msra.mxu0 0.0
    %1381 = vmatprep.subr.mxu0 0.0
    %1382 = vmatpush1.msra.mxu0 0.0
    %1383 = vmatprep.subr.mxu0 0.0
    %1384 = vmatpush1.msra.mxu0 0.0
    %1385 = vmatprep.subr.mxu0 0.0
    %1386 = vmatpush1.msra.mxu0 0.0
    %1387 = vmatprep.mubr.f32.mxu0 0.0
    %v1388 = vand.u32 %v736, 4294901760
    %1389 = vmatmul.mubr.f32.gmra.mrb[0].mxu0 %v1388
    %v1390 = vpop.f32.mrb[0].mxu0
    %v1391 = vadd.f32 %v1304, %v1390
    %v1392 = vpop.f32.mrb[0].mxu0
    %1393 = vdwg.mxu0
    %v1394 = vmul.f32 %v1391, 0.03125
    %v1395 = vsub.f32 %v736, %v1394
    %v1396 = vmul.f32 %v1395, %v1395
    %1397 = vmatprep.subr.mxu0 0.0
    %v1398 = vand.u32 %v737, 4294901760
    %1399 = vmatpush1.msra.mxu0 %v1398
    %1400 = vmatprep.subr.mxu0 0.0
    %v1401 = vand.u32 %v738, 4294901760
    %1402 = vmatpush1.msra.mxu0 %v1401
    %1403 = vmatprep.subr.mxu0 0.0
    %v1404 = vand.u32 %v739, 4294901760
    %1405 = vmatpush1.msra.mxu0 %v1404
    %1406 = vmatprep.subr.mxu0 0.0
    %v1407 = vand.u32 %v740, 4294901760
    %1408 = vmatpush1.msra.mxu0 %v1407
    %1409 = vmatprep.subr.mxu0 0.0
    %v1410 = vand.u32 %v741, 4294901760
    %1411 = vmatpush1.msra.mxu0 %v1410
    %1412 = vmatprep.subr.mxu0 0.0
    %v1413 = vand.u32 %v742, 4294901760
    %1414 = vmatpush1.msra.mxu0 %v1413
    %1415 = vmatprep.subr.mxu0 0.0
    %v1416 = vand.u32 %v743, 4294901760
    %1417 = vmatpush1.msra.mxu0 %v1416
    %1418 = vmatprep.subr.mxu0 0.0
    %v1419 = vand.u32 %v744, 4294901760
    %1420 = vmatpush1.msra.mxu0 %v1419
    %1421 = vmatprep.subr.mxu0 0.0
    %v1422 = vand.u32 %v745, 4294901760
    %1423 = vmatpush1.msra.mxu0 %v1422
    %1424 = vmatprep.subr.mxu0 0.0
    %v1425 = vand.u32 %v746, 4294901760
    %1426 = vmatpush1.msra.mxu0 %v1425
    %1427 = vmatprep.subr.mxu0 0.0
    %v1428 = vand.u32 %v747, 4294901760
    %1429 = vmatpush1.msra.mxu0 %v1428
    %1430 = vmatprep.subr.mxu0 0.0
    %v1431 = vand.u32 %v748, 4294901760
    %1432 = vmatpush1.msra.mxu0 %v1431
    %1433 = vmatprep.subr.mxu0 0.0
    %v1434 = vand.u32 %v749, 4294901760
    %1435 = vmatpush1.msra.mxu0 %v1434
    %1436 = vmatprep.subr.mxu0 0.0
    %v1437 = vand.u32 %v750, 4294901760
    %1438 = vmatpush1.msra.mxu0 %v1437
    %1439 = vmatprep.subr.mxu0 0.0
    %v1440 = vand.u32 %v751, 4294901760
    %1441 = vmatpush1.msra.mxu0 %v1440
    %1442 = vmatprep.subr.mxu0 0.0
    %v1443 = vand.u32 %v752, 4294901760
    %1444 = vmatpush1.msra.mxu0 %v1443
    %1445 = vmatprep.subr.mxu0 0.0
    %1446 = vmatpush1.msra.mxu0 0.0
    %1447 = vmatprep.subr.mxu0 0.0
    %1448 = vmatpush1.msra.mxu0 0.0
    %1449 = vmatprep.subr.mxu0 0.0
    %1450 = vmatpush1.msra.mxu0 0.0
    %1451 = vmatprep.subr.mxu0 0.0
    %1452 = vmatpush1.msra.mxu0 0.0
    %1453 = vmatprep.subr.mxu0 0.0
    %1454 = vmatpush1.msra.mxu0 0.0
    %1455 = vmatprep.subr.mxu0 0.0
    %1456 = vmatpush1.msra.mxu0 0.0
    %1457 = vmatprep.subr.mxu0 0.0
    %1458 = vmatpush1.msra.mxu0 0.0
    %1459 = vmatprep.subr.mxu0 0.0
    %1460 = vmatpush1.msra.mxu0 0.0
    %1461 = vmatprep.subr.mxu0 0.0
    %1462 = vmatpush1.msra.mxu0 0.0
    %1463 = vmatprep.subr.mxu0 0.0
    %1464 = vmatpush1.msra.mxu0 0.0
    %1465 = vmatprep.subr.mxu0 0.0
    %1466 = vmatpush1.msra.mxu0 0.0
    %1467 = vmatprep.subr.mxu0 0.0
    %1468 = vmatpush1.msra.mxu0 0.0
    %1469 = vmatprep.subr.mxu0 0.0
    %1470 = vmatpush1.msra.mxu0 0.0
    %1471 = vmatprep.subr.mxu0 0.0
    %1472 = vmatpush1.msra.mxu0 0.0
    %1473 = vmatprep.subr.mxu0 0.0
    %1474 = vmatpush1.msra.mxu0 0.0
    %1475 = vmatprep.subr.mxu0 0.0
    %1476 = vmatpush1.msra.mxu0 0.0
    %1477 = vmatprep.mubr.f32.mxu0 0.0
    %v1478 = vand.u32 %v1396, 4294901760
    %v1479 = vsub.f32 %v1396, %v1478
    %v1480 = vand.u32 %v1479, 4294901760
    %v1481 = vsub.f32 %v1479, %v1480
    %v1482 = vand.u32 %v1481, 4294901760
    %1483 = vmatmul.mubr.f32.gmra.mrb[0].mxu0 %v1482
    %v1484 = vpop.f32.mrb[0].mxu0
    %v1485 = vadd.f32 0.0, %v1484
    %v1486 = vpop.f32.mrb[0].mxu0
    %1487 = vdwg.mxu0
    %1488 = vmatprep.subr.mxu0 0.0
    %v1489 = vand.u32 %v737, 4294901760
    %v1490 = vsub.f32 %v737, %v1489
    %v1491 = vand.u32 %v1490, 4294901760
    %v1492 = vsub.f32 %v1490, %v1491
    %v1493 = vand.u32 %v1492, 4294901760
    %1494 = vmatpush1.msra.mxu0 %v1493
    %1495 = vmatprep.subr.mxu0 0.0
    %v1496 = vand.u32 %v738, 4294901760
    %v1497 = vsub.f32 %v738, %v1496
    %v1498 = vand.u32 %v1497, 4294901760
    %v1499 = vsub.f32 %v1497, %v1498
    %v1500 = vand.u32 %v1499, 4294901760
    %1501 = vmatpush1.msra.mxu0 %v1500
    %1502 = vmatprep.subr.mxu0 0.0
    %v1503 = vand.u32 %v739, 4294901760
    %v1504 = vsub.f32 %v739, %v1503
    %v1505 = vand.u32 %v1504, 4294901760
    %v1506 = vsub.f32 %v1504, %v1505
    %v1507 = vand.u32 %v1506, 4294901760
    %1508 = vmatpush1.msra.mxu0 %v1507
    %1509 = vmatprep.subr.mxu0 0.0
    %v1510 = vand.u32 %v740, 4294901760
    %v1511 = vsub.f32 %v740, %v1510
    %v1512 = vand.u32 %v1511, 4294901760
    %v1513 = vsub.f32 %v1511, %v1512
    %v1514 = vand.u32 %v1513, 4294901760
    %1515 = vmatpush1.msra.mxu0 %v1514
    %1516 = vmatprep.subr.mxu0 0.0
    %v1517 = vand.u32 %v741, 4294901760
    %v1518 = vsub.f32 %v741, %v1517
    %v1519 = vand.u32 %v1518, 4294901760
    %v1520 = vsub.f32 %v1518, %v1519
    %v1521 = vand.u32 %v1520, 4294901760
    %1522 = vmatpush1.msra.mxu0 %v1521
    %1523 = vmatprep.subr.mxu0 0.0
    %v1524 = vand.u32 %v742, 4294901760
    %v1525 = vsub.f32 %v742, %v1524
    %v1526 = vand.u32 %v1525, 4294901760
    %v1527 = vsub.f32 %v1525, %v1526
    %v1528 = vand.u32 %v1527, 4294901760
    %1529 = vmatpush1.msra.mxu0 %v1528
    %1530 = vmatprep.subr.mxu0 0.0
    %v1531 = vand.u32 %v743, 4294901760
    %v1532 = vsub.f32 %v743, %v1531
    %v1533 = vand.u32 %v1532, 4294901760
    %v1534 = vsub.f32 %v1532, %v1533
    %v1535 = vand.u32 %v1534, 4294901760
    %1536 = vmatpush1.msra.mxu0 %v1535
    %1537 = vmatprep.subr.mxu0 0.0
    %v1538 = vand.u32 %v744, 4294901760
    %v1539 = vsub.f32 %v744, %v1538
    %v1540 = vand.u32 %v1539, 4294901760
    %v1541 = vsub.f32 %v1539, %v1540
    %v1542 = vand.u32 %v1541, 4294901760
    %1543 = vmatpush1.msra.mxu0 %v1542
    %1544 = vmatprep.subr.mxu0 0.0
    %v1545 = vand.u32 %v745, 4294901760
    %v1546 = vsub.f32 %v745, %v1545
    %v1547 = vand.u32 %v1546, 4294901760
    %v1548 = vsub.f32 %v1546, %v1547
    %v1549 = vand.u32 %v1548, 4294901760
    %1550 = vmatpush1.msra.mxu0 %v1549
    %1551 = vmatprep.subr.mxu0 0.0
    %v1552 = vand.u32 %v746, 4294901760
    %v1553 = vsub.f32 %v746, %v1552
    %v1554 = vand.u32 %v1553, 4294901760
    %v1555 = vsub.f32 %v1553, %v1554
    %v1556 = vand.u32 %v1555, 4294901760
    %1557 = vmatpush1.msra.mxu0 %v1556
    %1558 = vmatprep.subr.mxu0 0.0
    %v1559 = vand.u32 %v747, 4294901760
    %v1560 = vsub.f32 %v747, %v1559
    %v1561 = vand.u32 %v1560, 4294901760
    %v1562 = vsub.f32 %v1560, %v1561
    %v1563 = vand.u32 %v1562, 4294901760
    %1564 = vmatpush1.msra.mxu0 %v1563
    %1565 = vmatprep.subr.mxu0 0.0
    %v1566 = vand.u32 %v748, 4294901760
    %v1567 = vsub.f32 %v748, %v1566
    %v1568 = vand.u32 %v1567, 4294901760
    %v1569 = vsub.f32 %v1567, %v1568
    %v1570 = vand.u32 %v1569, 4294901760
    %1571 = vmatpush1.msra.mxu0 %v1570
    %1572 = vmatprep.subr.mxu0 0.0
    %v1573 = vand.u32 %v749, 4294901760
    %v1574 = vsub.f32 %v749, %v1573
    %v1575 = vand.u32 %v1574, 4294901760
    %v1576 = vsub.f32 %v1574, %v1575
    %v1577 = vand.u32 %v1576, 4294901760
    %1578 = vmatpush1.msra.mxu0 %v1577
    %1579 = vmatprep.subr.mxu0 0.0
    %v1580 = vand.u32 %v750, 4294901760
    %v1581 = vsub.f32 %v750, %v1580
    %v1582 = vand.u32 %v1581, 4294901760
    %v1583 = vsub.f32 %v1581, %v1582
    %v1584 = vand.u32 %v1583, 4294901760
    %1585 = vmatpush1.msra.mxu0 %v1584
    %1586 = vmatprep.subr.mxu0 0.0
    %v1587 = vand.u32 %v751, 4294901760
    %v1588 = vsub.f32 %v751, %v1587
    %v1589 = vand.u32 %v1588, 4294901760
    %v1590 = vsub.f32 %v1588, %v1589
    %v1591 = vand.u32 %v1590, 4294901760
    %1592 = vmatpush1.msra.mxu0 %v1591
    %1593 = vmatprep.subr.mxu0 0.0
    %v1594 = vand.u32 %v752, 4294901760
    %v1595 = vsub.f32 %v752, %v1594
    %v1596 = vand.u32 %v1595, 4294901760
    %v1597 = vsub.f32 %v1595, %v1596
    %v1598 = vand.u32 %v1597, 4294901760
    %1599 = vmatpush1.msra.mxu0 %v1598
    %1600 = vmatprep.subr.mxu0 0.0
    %1601 = vmatpush1.msra.mxu0 0.0
    %1602 = vmatprep.subr.mxu0 0.0
    %1603 = vmatpush1.msra.mxu0 0.0
    %1604 = vmatprep.subr.mxu0 0.0
    %1605 = vmatpush1.msra.mxu0 0.0
    %1606 = vmatprep.subr.mxu0 0.0
    %1607 = vmatpush1.msra.mxu0 0.0
    %1608 = vmatprep.subr.mxu0 0.0
    %1609 = vmatpush1.msra.mxu0 0.0
    %1610 = vmatprep.subr.mxu0 0.0
    %1611 = vmatpush1.msra.mxu0 0.0
    %1612 = vmatprep.subr.mxu0 0.0
    %1613 = vmatpush1.msra.mxu0 0.0
    %1614 = vmatprep.subr.mxu0 0.0
    %1615 = vmatpush1.msra.mxu0 0.0
    %1616 = vmatprep.subr.mxu0 0.0
    %1617 = vmatpush1.msra.mxu0 0.0
    %1618 = vmatprep.subr.mxu0 0.0
    %1619 = vmatpush1.msra.mxu0 0.0
    %1620 = vmatprep.subr.mxu0 0.0
    %1621 = vmatpush1.msra.mxu0 0.0
    %1622 = vmatprep.subr.mxu0 0.0
    %1623 = vmatpush1.msra.mxu0 0.0
    %1624 = vmatprep.subr.mxu0 0.0
    %1625 = vmatpush1.msra.mxu0 0.0
    %1626 = vmatprep.subr.mxu0 0.0
    %1627 = vmatpush1.msra.mxu0 0.0
    %1628 = vmatprep.subr.mxu0 0.0
    %1629 = vmatpush1.msra.mxu0 0.0
    %1630 = vmatprep.subr.mxu0 0.0
    %1631 = vmatpush1.msra.mxu0 0.0
    %1632 = vmatprep.mubr.f32.mxu0 0.0
    %v1633 = vand.u32 %v1396, 4294901760
    %1634 = vmatmul.mubr.f32.gmra.mrb[0].mxu0 %v1633
    %v1635 = vpop.f32.mrb[0].mxu0
    %v1636 = vadd.f32 %v1485, %v1635
    %v1637 = vpop.f32.mrb[0].mxu0
    %1638 = vdwg.mxu0
    %1639 = vmatprep.subr.mxu0 0.0
    %v1640 = vand.u32 %v737, 4294901760
    %v1641 = vsub.f32 %v737, %v1640
    %1642 = vmatpush1.msra.mxu0 %v1641
    %1643 = vmatprep.subr.mxu0 0.0
    %v1644 = vand.u32 %v738, 4294901760
    %v1645 = vsub.f32 %v738, %v1644
    %1646 = vmatpush1.msra.mxu0 %v1645
    %1647 = vmatprep.subr.mxu0 0.0
    %v1648 = vand.u32 %v739, 4294901760
    %v1649 = vsub.f32 %v739, %v1648
    %1650 = vmatpush1.msra.mxu0 %v1649
    %1651 = vmatprep.subr.mxu0 0.0
    %v1652 = vand.u32 %v740, 4294901760
    %v1653 = vsub.f32 %v740, %v1652
    %1654 = vmatpush1.msra.mxu0 %v1653
    %1655 = vmatprep.subr.mxu0 0.0
    %v1656 = vand.u32 %v741, 4294901760
    %v1657 = vsub.f32 %v741, %v1656
    %1658 = vmatpush1.msra.mxu0 %v1657
    %1659 = vmatprep.subr.mxu0 0.0
    %v1660 = vand.u32 %v742, 4294901760
    %v1661 = vsub.f32 %v742, %v1660
    %1662 = vmatpush1.msra.mxu0 %v1661
    %1663 = vmatprep.subr.mxu0 0.0
    %v1664 = vand.u32 %v743, 4294901760
    %v1665 = vsub.f32 %v743, %v1664
    %1666 = vmatpush1.msra.mxu0 %v1665
    %1667 = vmatprep.subr.mxu0 0.0
    %v1668 = vand.u32 %v744, 4294901760
    %v1669 = vsub.f32 %v744, %v1668
    %1670 = vmatpush1.msra.mxu0 %v1669
    %1671 = vmatprep.subr.mxu0 0.0
    %v1672 = vand.u32 %v745, 4294901760
    %v1673 = vsub.f32 %v745, %v1672
    %1674 = vmatpush1.msra.mxu0 %v1673
    %1675 = vmatprep.subr.mxu0 0.0
    %v1676 = vand.u32 %v746, 4294901760
    %v1677 = vsub.f32 %v746, %v1676
    %1678 = vmatpush1.msra.mxu0 %v1677
    %1679 = vmatprep.subr.mxu0 0.0
    %v1680 = vand.u32 %v747, 4294901760
    %v1681 = vsub.f32 %v747, %v1680
    %1682 = vmatpush1.msra.mxu0 %v1681
    %1683 = vmatprep.subr.mxu0 0.0
    %v1684 = vand.u32 %v748, 4294901760
    %v1685 = vsub.f32 %v748, %v1684
    %1686 = vmatpush1.msra.mxu0 %v1685
    %1687 = vmatprep.subr.mxu0 0.0
    %v1688 = vand.u32 %v749, 4294901760
    %v1689 = vsub.f32 %v749, %v1688
    %1690 = vmatpush1.msra.mxu0 %v1689
    %1691 = vmatprep.subr.mxu0 0.0
    %v1692 = vand.u32 %v750, 4294901760
    %v1693 = vsub.f32 %v750, %v1692
    %1694 = vmatpush1.msra.mxu0 %v1693
    %1695 = vmatprep.subr.mxu0 0.0
    %v1696 = vand.u32 %v751, 4294901760
    %v1697 = vsub.f32 %v751, %v1696
    %1698 = vmatpush1.msra.mxu0 %v1697
    %1699 = vmatprep.subr.mxu0 0.0
    %v1700 = vand.u32 %v752, 4294901760
    %v1701 = vsub.f32 %v752, %v1700
    %1702 = vmatpush1.msra.mxu0 %v1701
    %1703 = vmatprep.subr.mxu0 0.0
    %1704 = vmatpush1.msra.mxu0 0.0
    %1705 = vmatprep.subr.mxu0 0.0
    %1706 = vmatpush1.msra.mxu0 0.0
    %1707 = vmatprep.subr.mxu0 0.0
    %1708 = vmatpush1.msra.mxu0 0.0
    %1709 = vmatprep.subr.mxu0 0.0
    %1710 = vmatpush1.msra.mxu0 0.0
    %1711 = vmatprep.subr.mxu0 0.0
    %1712 = vmatpush1.msra.mxu0 0.0
    %1713 = vmatprep.subr.mxu0 0.0
    %1714 = vmatpush1.msra.mxu0 0.0
    %1715 = vmatprep.subr.mxu0 0.0
    %1716 = vmatpush1.msra.mxu0 0.0
    %1717 = vmatprep.subr.mxu0 0.0
    %1718 = vmatpush1.msra.mxu0 0.0
    %1719 = vmatprep.subr.mxu0 0.0
    %1720 = vmatpush1.msra.mxu0 0.0
    %1721 = vmatprep.subr.mxu0 0.0
    %1722 = vmatpush1.msra.mxu0 0.0
    %1723 = vmatprep.subr.mxu0 0.0
    %1724 = vmatpush1.msra.mxu0 0.0
    %1725 = vmatprep.subr.mxu0 0.0
    %1726 = vmatpush1.msra.mxu0 0.0
    %1727 = vmatprep.subr.mxu0 0.0
    %1728 = vmatpush1.msra.mxu0 0.0
    %1729 = vmatprep.subr.mxu0 0.0
    %1730 = vmatpush1.msra.mxu0 0.0
    %1731 = vmatprep.subr.mxu0 0.0
    %1732 = vmatpush1.msra.mxu0 0.0
    %1733 = vmatprep.subr.mxu0 0.0
    %1734 = vmatpush1.msra.mxu0 0.0
    %1735 = vmatprep.mubr.f32.mxu0 0.0
    %v1736 = vand.u32 %v1396, 4294901760
    %v1737 = vsub.f32 %v1396, %v1736
    %1738 = vmatmul.mubr.f32.gmra.mrb[0].mxu0 %v1737
    %v1739 = vpop.f32.mrb[0].mxu0
    %v1740 = vadd.f32 %v1636, %v1739
    %v1741 = vpop.f32.mrb[0].mxu0
    %1742 = vdwg.mxu0
    %1743 = vmatprep.subr.mxu0 0.0
    %v1744 = vand.u32 %v737, 4294901760
    %1745 = vmatpush1.msra.mxu0 %v1744
    %1746 = vmatprep.subr.mxu0 0.0
    %v1747 = vand.u32 %v738, 4294901760
    %1748 = vmatpush1.msra.mxu0 %v1747
    %1749 = vmatprep.subr.mxu0 0.0
    %v1750 = vand.u32 %v739, 4294901760
    %1751 = vmatpush1.msra.mxu0 %v1750
    %1752 = vmatprep.subr.mxu0 0.0
    %v1753 = vand.u32 %v740, 4294901760
    %1754 = vmatpush1.msra.mxu0 %v1753
    %1755 = vmatprep.subr.mxu0 0.0
    %v1756 = vand.u32 %v741, 4294901760
    %1757 = vmatpush1.msra.mxu0 %v1756
    %1758 = vmatprep.subr.mxu0 0.0
    %v1759 = vand.u32 %v742, 4294901760
    %1760 = vmatpush1.msra.mxu0 %v1759
    %1761 = vmatprep.subr.mxu0 0.0
    %v1762 = vand.u32 %v743, 4294901760
    %1763 = vmatpush1.msra.mxu0 %v1762
    %1764 = vmatprep.subr.mxu0 0.0
    %v1765 = vand.u32 %v744, 4294901760
    %1766 = vmatpush1.msra.mxu0 %v1765
    %1767 = vmatprep.subr.mxu0 0.0
    %v1768 = vand.u32 %v745, 4294901760
    %1769 = vmatpush1.msra.mxu0 %v1768
    %1770 = vmatprep.subr.mxu0 0.0
    %v1771 = vand.u32 %v746, 4294901760
    %1772 = vmatpush1.msra.mxu0 %v1771
    %1773 = vmatprep.subr.mxu0 0.0
    %v1774 = vand.u32 %v747, 4294901760
    %1775 = vmatpush1.msra.mxu0 %v1774
    %1776 = vmatprep.subr.mxu0 0.0
    %v1777 = vand.u32 %v748, 4294901760
    %1778 = vmatpush1.msra.mxu0 %v1777
    %1779 = vmatprep.subr.mxu0 0.0
    %v1780 = vand.u32 %v749, 4294901760
    %1781 = vmatpush1.msra.mxu0 %v1780
    %1782 = vmatprep.subr.mxu0 0.0
    %v1783 = vand.u32 %v750, 4294901760
    %1784 = vmatpush1.msra.mxu0 %v1783
    %1785 = vmatprep.subr.mxu0 0.0
    %v1786 = vand.u32 %v751, 4294901760
    %1787 = vmatpush1.msra.mxu0 %v1786
    %1788 = vmatprep.subr.mxu0 0.0
    %v1789 = vand.u32 %v752, 4294901760
    %1790 = vmatpush1.msra.mxu0 %v1789
    %1791 = vmatprep.subr.mxu0 0.0
    %1792 = vmatpush1.msra.mxu0 0.0
    %1793 = vmatprep.subr.mxu0 0.0
    %1794 = vmatpush1.msra.mxu0 0.0
    %1795 = vmatprep.subr.mxu0 0.0
    %1796 = vmatpush1.msra.mxu0 0.0
    %1797 = vmatprep.subr.mxu0 0.0
    %1798 = vmatpush1.msra.mxu0 0.0
    %1799 = vmatprep.subr.mxu0 0.0
    %1800 = vmatpush1.msra.mxu0 0.0
    %1801 = vmatprep.subr.mxu0 0.0
    %1802 = vmatpush1.msra.mxu0 0.0
    %1803 = vmatprep.subr.mxu0 0.0
    %1804 = vmatpush1.msra.mxu0 0.0
    %1805 = vmatprep.subr.mxu0 0.0
    %1806 = vmatpush1.msra.mxu0 0.0
    %1807 = vmatprep.subr.mxu0 0.0
    %1808 = vmatpush1.msra.mxu0 0.0
    %1809 = vmatprep.subr.mxu0 0.0
    %1810 = vmatpush1.msra.mxu0 0.0
    %1811 = vmatprep.subr.mxu0 0.0
    %1812 = vmatpush1.msra.mxu0 0.0
    %1813 = vmatprep.subr.mxu0 0.0
    %1814 = vmatpush1.msra.mxu0 0.0
    %1815 = vmatprep.subr.mxu0 0.0
    %1816 = vmatpush1.msra.mxu0 0.0
    %1817 = vmatprep.subr.mxu0 0.0
    %1818 = vmatpush1.msra.mxu0 0.0
    %1819 = vmatprep.subr.mxu0 0.0
    %1820 = vmatpush1.msra.mxu0 0.0
    %1821 = vmatprep.subr.mxu0 0.0
    %1822 = vmatpush1.msra.mxu0 0.0
    %1823 = vmatprep.mubr.f32.mxu0 0.0
    %v1824 = vand.u32 %v1396, 4294901760
    %v1825 = vsub.f32 %v1396, %v1824
    %v1826 = vand.u32 %v1825, 4294901760
    %1827 = vmatmul.mubr.f32.gmra.mrb[0].mxu0 %v1826
    %v1828 = vpop.f32.mrb[0].mxu0
    %v1829 = vadd.f32 %v1740, %v1828
    %v1830 = vpop.f32.mrb[0].mxu0
    %1831 = vdwg.mxu0
    %1832 = vmatprep.subr.mxu0 0.0
    %v1833 = vand.u32 %v737, 4294901760
    %v1834 = vsub.f32 %v737, %v1833
    %v1835 = vand.u32 %v1834, 4294901760
    %1836 = vmatpush1.msra.mxu0 %v1835
    %1837 = vmatprep.subr.mxu0 0.0
    %v1838 = vand.u32 %v738, 4294901760
    %v1839 = vsub.f32 %v738, %v1838
    %v1840 = vand.u32 %v1839, 4294901760
    %1841 = vmatpush1.msra.mxu0 %v1840
    %1842 = vmatprep.subr.mxu0 0.0
    %v1843 = vand.u32 %v739, 4294901760
    %v1844 = vsub.f32 %v739, %v1843
    %v1845 = vand.u32 %v1844, 4294901760
    %1846 = vmatpush1.msra.mxu0 %v1845
    %1847 = vmatprep.subr.mxu0 0.0
    %v1848 = vand.u32 %v740, 4294901760
    %v1849 = vsub.f32 %v740, %v1848
    %v1850 = vand.u32 %v1849, 4294901760
    %1851 = vmatpush1.msra.mxu0 %v1850
    %1852 = vmatprep.subr.mxu0 0.0
    %v1853 = vand.u32 %v741, 4294901760
    %v1854 = vsub.f32 %v741, %v1853
    %v1855 = vand.u32 %v1854, 4294901760
    %1856 = vmatpush1.msra.mxu0 %v1855
    %1857 = vmatprep.subr.mxu0 0.0
    %v1858 = vand.u32 %v742, 4294901760
    %v1859 = vsub.f32 %v742, %v1858
    %v1860 = vand.u32 %v1859, 4294901760
    %1861 = vmatpush1.msra.mxu0 %v1860
    %1862 = vmatprep.subr.mxu0 0.0
    %v1863 = vand.u32 %v743, 4294901760
    %v1864 = vsub.f32 %v743, %v1863
    %v1865 = vand.u32 %v1864, 4294901760
    %1866 = vmatpush1.msra.mxu0 %v1865
    %1867 = vmatprep.subr.mxu0 0.0
    %v1868 = vand.u32 %v744, 4294901760
    %v1869 = vsub.f32 %v744, %v1868
    %v1870 = vand.u32 %v1869, 4294901760
    %1871 = vmatpush1.msra.mxu0 %v1870
    %1872 = vmatprep.subr.mxu0 0.0
    %v1873 = vand.u32 %v745, 4294901760
    %v1874 = vsub.f32 %v745, %v1873
    %v1875 = vand.u32 %v1874, 4294901760
    %1876 = vmatpush1.msra.mxu0 %v1875
    %1877 = vmatprep.subr.mxu0 0.0
    %v1878 = vand.u32 %v746, 4294901760
    %v1879 = vsub.f32 %v746, %v1878
    %v1880 = vand.u32 %v1879, 4294901760
    %1881 = vmatpush1.msra.mxu0 %v1880
    %1882 = vmatprep.subr.mxu0 0.0
    %v1883 = vand.u32 %v747, 4294901760
    %v1884 = vsub.f32 %v747, %v1883
    %v1885 = vand.u32 %v1884, 4294901760
    %1886 = vmatpush1.msra.mxu0 %v1885
    %1887 = vmatprep.subr.mxu0 0.0
    %v1888 = vand.u32 %v748, 4294901760
    %v1889 = vsub.f32 %v748, %v1888
    %v1890 = vand.u32 %v1889, 4294901760
    %1891 = vmatpush1.msra.mxu0 %v1890
    %1892 = vmatprep.subr.mxu0 0.0
    %v1893 = vand.u32 %v749, 4294901760
    %v1894 = vsub.f32 %v749, %v1893
    %v1895 = vand.u32 %v1894, 4294901760
    %1896 = vmatpush1.msra.mxu0 %v1895
    %1897 = vmatprep.subr.mxu0 0.0
    %v1898 = vand.u32 %v750, 4294901760
    %v1899 = vsub.f32 %v750, %v1898
    %v1900 = vand.u32 %v1899, 4294901760
    %1901 = vmatpush1.msra.mxu0 %v1900
    %1902 = vmatprep.subr.mxu0 0.0
    %v1903 = vand.u32 %v751, 4294901760
    %v1904 = vsub.f32 %v751, %v1903
    %v1905 = vand.u32 %v1904, 4294901760
    %1906 = vmatpush1.msra.mxu0 %v1905
    %1907 = vmatprep.subr.mxu0 0.0
    %v1908 = vand.u32 %v752, 4294901760
    %v1909 = vsub.f32 %v752, %v1908
    %v1910 = vand.u32 %v1909, 4294901760
    %1911 = vmatpush1.msra.mxu0 %v1910
    %1912 = vmatprep.subr.mxu0 0.0
    %1913 = vmatpush1.msra.mxu0 0.0
    %1914 = vmatprep.subr.mxu0 0.0
    %1915 = vmatpush1.msra.mxu0 0.0
    %1916 = vmatprep.subr.mxu0 0.0
    %1917 = vmatpush1.msra.mxu0 0.0
    %1918 = vmatprep.subr.mxu0 0.0
    %1919 = vmatpush1.msra.mxu0 0.0
    %1920 = vmatprep.subr.mxu0 0.0
    %1921 = vmatpush1.msra.mxu0 0.0
    %1922 = vmatprep.subr.mxu0 0.0
    %1923 = vmatpush1.msra.mxu0 0.0
    %1924 = vmatprep.subr.mxu0 0.0
    %1925 = vmatpush1.msra.mxu0 0.0
    %1926 = vmatprep.subr.mxu0 0.0
    %1927 = vmatpush1.msra.mxu0 0.0
    %1928 = vmatprep.subr.mxu0 0.0
    %1929 = vmatpush1.msra.mxu0 0.0
    %1930 = vmatprep.subr.mxu0 0.0
    %1931 = vmatpush1.msra.mxu0 0.0
    %1932 = vmatprep.subr.mxu0 0.0
    %1933 = vmatpush1.msra.mxu0 0.0
    %1934 = vmatprep.subr.mxu0 0.0
    %1935 = vmatpush1.msra.mxu0 0.0
    %1936 = vmatprep.subr.mxu0 0.0
    %1937 = vmatpush1.msra.mxu0 0.0
    %1938 = vmatprep.subr.mxu0 0.0
    %1939 = vmatpush1.msra.mxu0 0.0
    %1940 = vmatprep.subr.mxu0 0.0
    %1941 = vmatpush1.msra.mxu0 0.0
    %1942 = vmatprep.subr.mxu0 0.0
    %1943 = vmatpush1.msra.mxu0 0.0
    %1944 = vmatprep.mubr.f32.mxu0 0.0
    %v1945 = vand.u32 %v1396, 4294901760
    %1946 = vmatmul.mubr.f32.gmra.mrb[0].mxu0 %v1945
    %v1947 = vpop.f32.mrb[0].mxu0
    %v1948 = vadd.f32 %v1829, %v1947
    %v1949 = vpop.f32.mrb[0].mxu0
    %1950 = vdwg.mxu0
    %1951 = vmatprep.subr.mxu0 0.0
    %v1952 = vand.u32 %v737, 4294901760
    %1953 = vmatpush1.msra.mxu0 %v1952
    %1954 = vmatprep.subr.mxu0 0.0
    %v1955 = vand.u32 %v738, 4294901760
    %1956 = vmatpush1.msra.mxu0 %v1955
    %1957 = vmatprep.subr.mxu0 0.0
    %v1958 = vand.u32 %v739, 4294901760
    %1959 = vmatpush1.msra.mxu0 %v1958
    %1960 = vmatprep.subr.mxu0 0.0
    %v1961 = vand.u32 %v740, 4294901760
    %1962 = vmatpush1.msra.mxu0 %v1961
    %1963 = vmatprep.subr.mxu0 0.0
    %v1964 = vand.u32 %v741, 4294901760
    %1965 = vmatpush1.msra.mxu0 %v1964
    %1966 = vmatprep.subr.mxu0 0.0
    %v1967 = vand.u32 %v742, 4294901760
    %1968 = vmatpush1.msra.mxu0 %v1967
    %1969 = vmatprep.subr.mxu0 0.0
    %v1970 = vand.u32 %v743, 4294901760
    %1971 = vmatpush1.msra.mxu0 %v1970
    %1972 = vmatprep.subr.mxu0 0.0
    %v1973 = vand.u32 %v744, 4294901760
    %1974 = vmatpush1.msra.mxu0 %v1973
    %1975 = vmatprep.subr.mxu0 0.0
    %v1976 = vand.u32 %v745, 4294901760
    %1977 = vmatpush1.msra.mxu0 %v1976
    %1978 = vmatprep.subr.mxu0 0.0
    %v1979 = vand.u32 %v746, 4294901760
    %1980 = vmatpush1.msra.mxu0 %v1979
    %1981 = vmatprep.subr.mxu0 0.0
    %v1982 = vand.u32 %v747, 4294901760
    %1983 = vmatpush1.msra.mxu0 %v1982
    %1984 = vmatprep.subr.mxu0 0.0
    %v1985 = vand.u32 %v748, 4294901760
    %1986 = vmatpush1.msra.mxu0 %v1985
    %1987 = vmatprep.subr.mxu0 0.0
    %v1988 = vand.u32 %v749, 4294901760
    %1989 = vmatpush1.msra.mxu0 %v1988
    %1990 = vmatprep.subr.mxu0 0.0
    %v1991 = vand.u32 %v750, 4294901760
    %1992 = vmatpush1.msra.mxu0 %v1991
    %1993 = vmatprep.subr.mxu0 0.0
    %v1994 = vand.u32 %v751, 4294901760
    %1995 = vmatpush1.msra.mxu0 %v1994
    %1996 = vmatprep.subr.mxu0 0.0
    %v1997 = vand.u32 %v752, 4294901760
    %1998 = vmatpush1.msra.mxu0 %v1997
    %1999 = vmatprep.subr.mxu0 0.0
    %2000 = vmatpush1.msra.mxu0 0.0
    %2001 = vmatprep.subr.mxu0 0.0
    %2002 = vmatpush1.msra.mxu0 0.0
    %2003 = vmatprep.subr.mxu0 0.0
    %2004 = vmatpush1.msra.mxu0 0.0
    %2005 = vmatprep.subr.mxu0 0.0
    %2006 = vmatpush1.msra.mxu0 0.0
    %2007 = vmatprep.subr.mxu0 0.0
    %2008 = vmatpush1.msra.mxu0 0.0
    %2009 = vmatprep.subr.mxu0 0.0
    %2010 = vmatpush1.msra.mxu0 0.0
    %2011 = vmatprep.subr.mxu0 0.0
    %2012 = vmatpush1.msra.mxu0 0.0
    %2013 = vmatprep.subr.mxu0 0.0
    %2014 = vmatpush1.msra.mxu0 0.0
    %2015 = vmatprep.subr.mxu0 0.0
    %2016 = vmatpush1.msra.mxu0 0.0
    %2017 = vmatprep.subr.mxu0 0.0
    %2018 = vmatpush1.msra.mxu0 0.0
    %2019 = vmatprep.subr.mxu0 0.0
    %2020 = vmatpush1.msra.mxu0 0.0
    %2021 = vmatprep.subr.mxu0 0.0
    %2022 = vmatpush1.msra.mxu0 0.0
    %2023 = vmatprep.subr.mxu0 0.0
    %2024 = vmatpush1.msra.mxu0 0.0
    %2025 = vmatprep.subr.mxu0 0.0
    %2026 = vmatpush1.msra.mxu0 0.0
    %2027 = vmatprep.subr.mxu0 0.0
    %2028 = vmatpush1.msra.mxu0 0.0
    %2029 = vmatprep.subr.mxu0 0.0
    %2030 = vmatpush1.msra.mxu0 0.0
    %2031 = vmatprep.mubr.f32.mxu0 0.0
    %v2032 = vand.u32 %v1396, 4294901760
    %2033 = vmatmul.mubr.f32.gmra.mrb[0].mxu0 %v2032
    %v2034 = vpop.f32.mrb[0].mxu0
    %v2035 = vadd.f32 %v1948, %v2034
    %v2036 = vpop.f32.mrb[0].mxu0
    %2037 = vdwg.mxu0
    %v2038 = vmul.f32 %v2035, 0.03125
    %v2039 = vadd.f32 %v2038, 1e-05
    %v2040 = vrsqrt.pop %v2039
    %v2041 = vmul.f32 %v1395, %v2040
    %2042 = vst [vmem:[#allocation11] sm:$0xf] %v2041
    // Predicated region
    $region34: #{tpu_custom_call.1} parent=1 // pred_check
      _
    $region35: #{tpu_custom_call.1} parent=1 // pred_check_branch
      %2044 = sbr.rel (0) target = $region37
    $region36: #{tpu_custom_call.1} parent=1 // pred_region
      %s2046 = ssub.s32 128, 128
      %2047 = vsyncadd [#allocation4], %s2046
      %s2049 = sshll.u32 [#allocation10], 4
      %s2050 = int_to_ptr.vmem [resolvable:$true] %s2049
      %2052 = dma.vmem_to_hbm [thread:$0]  %s2050, 128, %s4, [#allocation4]
    $region37: #{tpu_custom_call.1} parent=1 // pred_fallthru
      _
    // Predicated region
    $region38: #{tpu_custom_call.1} parent=1 // pred_check
      _
    $region39: #{tpu_custom_call.1} parent=1 // pred_check_branch
      %2054 = sbr.rel (0) target = $region41
    $region40: #{tpu_custom_call.1} parent=1 // pred_region
      %s2056 = ssub.s32 64, 64
      %2057 = vsyncadd [#allocation12], %s2056
      %s2059 = sshll.u32 [#allocation11], 4
      %s2060 = int_to_ptr.vmem [resolvable:$true] %s2059
      %2062 = dma.vmem_to_hbm [thread:$0]  %s2060, 64, %s5, [#allocation12]
    $region41: #{tpu_custom_call.1} parent=1 // pred_fallthru
      _
    // Predicated region
    $region42: #{tpu_custom_call.1} parent=1 // pred_check
      _
    $region43: #{tpu_custom_call.1} parent=1 // pred_check_branch
      %2064 = sbr.rel (0) target = $region45
    $region44: #{tpu_custom_call.1} parent=1 // pred_region
      %2065 = dma.done [#allocation4], 128
    $region45: #{tpu_custom_call.1} parent=1 // pred_fallthru
      _
    // Predicated region
    $region46: #{tpu_custom_call.1} parent=1 // pred_check
      _
    $region47: #{tpu_custom_call.1} parent=1 // pred_check_branch
      %2067 = sbr.rel (0) target = $region49
    $region48: #{tpu_custom_call.1} parent=1 // pred_region
      %2068 = dma.done [#allocation12], 64
    $region49: #{tpu_custom_call.1} parent=1 // pred_fallthru
      _
    %2069 = vsyncpa [#allocation3], 1
    %2070 = vsyncpa [#allocation6], 1
    %2071 = vsyncpa [#allocation9], 1
    %2072 = vsyncpa [#allocation4], 1
    %2073 = vsyncpa [#allocation12], 1

</llo_original>
